<compile_context>
chip_gen: v7x
topology: tpu7x:2x2x1
jax: 0.10.0
libtpu: 0.0.40
codegen_flags: <defaults>
</compile_context>

<pallas_src>
import jax
import jax.numpy as jnp
from jax.experimental import pallas as pl
from jax.experimental.pallas import tpu as pltpu

BN_EPS = 1e-5


def _const_spec(block_shape):
    """Single-buffered BlockSpec for operands whose block index never changes."""
    index_map = lambda p, j: (0,) * len(block_shape)
    try:
        return pl.BlockSpec(block_shape, index_map, pipeline_mode=pl.Buffered(1))
    except Exception:  # older pallas without pipeline_mode kwarg
        return pl.BlockSpec(block_shape, index_map)


def _vmem_need(tb, B, C_in, C_hid, C_out, cache_h):
    f32, bf16 = 4, 2
    need = (
        2 * tb * C_in * f32                    # x tiles (double-buffered)
        + C_in * C_hid * bf16                  # w1 (bf16, single-buffered)
        + C_hid * C_out * bf16                 # w2 (bf16, single-buffered)
        + (2 * C_hid + C_out) * f32            # gamma / beta / b2
        + 2 * tb * C_out * f32                 # out tiles (double-buffered)
        + 2 * C_hid * f32                      # sum / sumsq scratch
        + 3 * tb * C_hid * f32                 # in-kernel h / hr / temporaries
        + tb * (C_in + C_hid + C_out) * bf16   # bf16 operand copies
    )
    if cache_h:
        need += B * C_hid * bf16               # cached activations
    return need


def prediction_head(x, w1, gamma, beta, w2, b2, *, out_dtype=jnp.float32, batch_tile=None):
    """x: (B, C_in) f32. w1: (C_in, C_hid). gamma/beta: (1, C_hid). w2: (C_hid, C_out). b2: (1, C_out)."""
    B, C_in = x.shape
    C_hid = w1.shape[1]
    C_out = w2.shape[1]

    # bf16 MXU operands: convert weights once at the boundary.
    w1_bf = w1.astype(jnp.bfloat16)
    w2_bf = w2.astype(jnp.bfloat16)

    # Generation-aware VMEM budget.
    try:
        vmem_cap = int(pltpu.get_tpu_info().vmem_capacity_bytes)
    except Exception:
        vmem_cap = 64 * 2**20  # assume v7x-sized VMEM if the query is unavailable
    budget = int(0.70 * vmem_cap)

    # Cache h (bf16) in VMEM iff it fits comfortably; otherwise recompute matmul1.
    cache_h = (B * C_hid * 2) <= budget // 2

    if batch_tile is None:
        batch_tile = B
        for tb in (1024, 512, 256, 128, 64, 32, 16, 8):
            if tb <= B and B % tb == 0 and _vmem_need(tb, B, C_in, C_hid, C_out, cache_h) <= budget:
                batch_tile = tb
                break
    assert B % batch_tile == 0
    nbt = B // batch_tile
    inv_batch = 1.0 / float(B)

    def kernel(x_ref, w1_ref, gamma_ref, beta_ref, w2_ref, b2_ref, o_ref, *scratch):
        if cache_h:
            sum_ref, sumsq_ref, h_ref = scratch
        else:
            sum_ref, sumsq_ref = scratch
        phase = pl.program_id(0)
        j = pl.program_id(1)

        @pl.when(phase == 0)
        def _accumulate_stats():
            # matmul1 on the MXU: bf16 operands, f32 accumulation.
            h = jnp.dot(x_ref[...].astype(jnp.bfloat16), w1_ref[...],
                        preferred_element_type=jnp.float32)        # (TB, C_hid) f32

            @pl.when(j == 0)
            def _init():
                sum_ref[...] = jnp.zeros_like(sum_ref)
                sumsq_ref[...] = jnp.zeros_like(sumsq_ref)

            sum_ref[...] += jnp.sum(h, axis=0, keepdims=True)
            sumsq_ref[...] += jnp.sum(h * h, axis=0, keepdims=True)
            if cache_h:
                h_ref[j] = h.astype(jnp.bfloat16)

        @pl.when(phase == 1)
        def _normalize_and_project():
            # Hoisted BN epilogue: fold stats into per-channel scale/shift once,
            # reusing the stat scratch to hold them for the remaining tiles.
            @pl.when(j == 0)
            def _fold_bn():
                mean = sum_ref[...] * inv_batch
                var = jnp.maximum(sumsq_ref[...] * inv_batch - mean * mean, 0.0)
                inv_std = jax.lax.rsqrt(var + BN_EPS)
                scale = gamma_ref[...] * inv_std
                sum_ref[...] = scale                       # now holds scale
                sumsq_ref[...] = beta_ref[...] - mean * scale   # now holds shift

            if cache_h:
                h = h_ref[j].astype(jnp.float32)
            else:
                h = jnp.dot(x_ref[...].astype(jnp.bfloat16), w1_ref[...],
                            preferred_element_type=jnp.float32)

            hr = jnp.maximum(h * sum_ref[...] + sumsq_ref[...], 0.0)
            out = jnp.dot(hr.astype(jnp.bfloat16), w2_ref[...],
                          preferred_element_type=jnp.float32) + b2_ref[...]
            o_ref[...] = out.astype(o_ref.dtype)

    grid = (2, nbt)  # axis 0: phase (stats, then normalize+project); axis 1: batch tiles

    # When h is cached, pin the x block during phase 1 so no new x DMAs are issued.
    if cache_h:
        x_index_map = lambda p, j: ((1 - p) * j + p * (nbt - 1), 0)
    else:
        x_index_map = lambda p, j: (j, 0)

    need = _vmem_need(batch_tile, B, C_in, C_hid, C_out, cache_h)
    vmem_limit = int(min(max(need + (8 << 20), 16 << 20), int(0.9 * vmem_cap)))

    mm1_passes = 1 if cache_h else 2
    cost = pl.CostEstimate(
        flops=2 * B * C_in * C_hid * mm1_passes + 2 * B * C_hid * C_out,
        transcendentals=C_hid,  # one rsqrt vector (hoisted BN fold)
        bytes_accessed=(B * C_in * 4 * mm1_passes        # x (read once if h cached)
                        + C_in * C_hid * 2 + C_hid * C_out * 2   # bf16 weights
                        + B * C_out * jnp.dtype(out_dtype).itemsize
                        + (2 * C_hid + C_out) * 4),
    )

    scratch_shapes = [
        pltpu.VMEM((1, C_hid), jnp.float32),   # running sum(h)  -> later: scale
        pltpu.VMEM((1, C_hid), jnp.float32),   # running sum(h*h) -> later: shift
    ]
    if cache_h:
        scratch_shapes.append(pltpu.VMEM((nbt, batch_tile, C_hid), jnp.bfloat16))

    return pl.pallas_call(
        kernel,
        out_shape=jax.ShapeDtypeStruct((B, C_out), out_dtype),
        grid_spec=pltpu.PrefetchScalarGridSpec(
            num_scalar_prefetch=0,
            grid=grid,
            in_specs=[
                pl.BlockSpec((batch_tile, C_in), x_index_map),   # x tile
                _const_spec((C_in, C_hid)),                      # w1 (bf16, resident)
                _const_spec((1, C_hid)),                         # gamma
                _const_spec((1, C_hid)),                         # beta
                _const_spec((C_hid, C_out)),                     # w2 (bf16, resident)
                _const_spec((1, C_out)),                         # b2
            ],
            # p*j pins the output block to index 0 for the whole stats phase, so each
            # output block is visited exactly once (phase 1) before its block index
            # changes and it is written back; nothing is written back during phase 0.
            out_specs=pl.BlockSpec((batch_tile, C_out), lambda p, j: (p * j, 0)),
            scratch_shapes=scratch_shapes,
        ),
        # Both axes sequential: the batch axis carries the BN-stat accumulator and the
        # phase axis must complete before normalization starts.
        compiler_params=pltpu.CompilerParams(
            dimension_semantics=("arbitrary", "arbitrary"),
            vmem_limit_bytes=vmem_limit,
        ),
        cost_estimate=cost,
    )(x, w1_bf, gamma, beta, w2_bf, b2)


if __name__ == "__main__":
    # Small lane-dense shapes (feature dims multiples of 128), scaled down from the
    # module defaults (in=2048 -> hidden=512 -> out=2048).
    B, C_IN, C_HID, C_OUT = 256, 256, 128, 256

    key = jax.random.PRNGKey(0)
    k_x, k_w1, k_w2, k_b2 = jax.random.split(key, 4)

    x = jax.random.normal(k_x, (B, C_IN), dtype=jnp.float32)
    w1 = jax.random.normal(k_w1, (C_IN, C_HID), dtype=jnp.float32) * (1.0 / jnp.sqrt(C_IN))
    gamma = jnp.ones((1, C_HID), dtype=jnp.float32)    # BatchNorm1d weight
    beta = jnp.zeros((1, C_HID), dtype=jnp.float32)    # BatchNorm1d bias
    w2 = jax.random.normal(k_w2, (C_HID, C_OUT), dtype=jnp.float32) * (1.0 / jnp.sqrt(C_HID))
    b2 = jax.random.normal(k_b2, (1, C_OUT), dtype=jnp.float32) * 0.01

    out = jax.block_until_ready(prediction_head(x, w1, gamma, beta, w2, b2))
    assert out.shape == (B, C_OUT)

    # Reference mirroring the kernel's numerics: bf16 MXU operands / f32 accumulation,
    # f32 batch stats, bf16 activation cache between the phases.
    w1_bf = w1.astype(jnp.bfloat16)
    w2_bf = w2.astype(jnp.bfloat16)
    h = jnp.dot(x.astype(jnp.bfloat16), w1_bf, preferred_element_type=jnp.float32)
    mu = jnp.mean(h, axis=0, keepdims=True)
    var = jnp.maximum(jnp.mean(h * h, axis=0, keepdims=True) - mu * mu, 0.0)
    scale = gamma * jax.lax.rsqrt(var + BN_EPS)
    shift = beta - mu * scale
    h_cached = h.astype(jnp.bfloat16).astype(jnp.float32)   # bf16 VMEM cache round-trip
    hr = jnp.maximum(h_cached * scale + shift, 0.0)
    ref = jnp.dot(hr.astype(jnp.bfloat16), w2_bf, preferred_element_type=jnp.float32) + b2
    assert jnp.allclose(out, ref, atol=3e-3, rtol=3e-3), "mismatch vs bf16-matmul reference"

    # Looser sanity check vs pure-f32 math (bounds the bf16 operand rounding).
    h32 = x @ w1
    mu32 = jnp.mean(h32, axis=0, keepdims=True)
    var32 = jnp.mean((h32 - mu32) ** 2, axis=0, keepdims=True)
    ref32 = jnp.maximum((h32 - mu32) / jnp.sqrt(var32 + BN_EPS) * gamma + beta, 0.0) @ w2 + b2
    assert jnp.allclose(out, ref32, atol=1e-1, rtol=1e-1), "mismatch vs f32 reference"

    print("KERNEL_OK")
</pallas_src>

<mosaic_0001>
module attributes {stable_mosaic.version = 11 : i64} {
  func.func @kernel(%arg0: i32, %arg1: i32, %arg2: memref<256x256xf32, #tpu.memory_space<vmem>>, %arg3: memref<256x128xbf16, #tpu.memory_space<vmem>>, %arg4: memref<1x128xf32, #tpu.memory_space<vmem>>, %arg5: memref<1x128xf32, #tpu.memory_space<vmem>>, %arg6: memref<128x256xbf16, #tpu.memory_space<vmem>>, %arg7: memref<1x256xf32, #tpu.memory_space<vmem>>, %arg8: memref<256x256xf32, #tpu.memory_space<vmem>>, %arg9: memref<1x128xf32, #tpu.memory_space<vmem>>, %arg10: memref<1x128xf32, #tpu.memory_space<vmem>>, %arg11: memref<1x256x128xbf16, #tpu.memory_space<vmem>>) attributes {dimension_semantics = [#tpu.dimension_semantics<arbitrary>, #tpu.dimension_semantics<arbitrary>], iteration_bounds = array<i64: 2, 1>, scalar_prefetch = 0 : i64, scratch_operands = 3 : i64, tpu.core_type = #tpu.core_type<tc>, window_params = [{transform_indices = @transform_0, window_bounds = array<i64: 256, 256>}, {pipeline_mode = #tpu.pipeline_mode<synchronous>, transform_indices = @transform_1, window_bounds = array<i64: 256, 128>}, {pipeline_mode = #tpu.pipeline_mode<synchronous>, transform_indices = @transform_2, window_bounds = array<i64: 1, 128>}, {pipeline_mode = #tpu.pipeline_mode<synchronous>, transform_indices = @transform_3, window_bounds = array<i64: 1, 128>}, {pipeline_mode = #tpu.pipeline_mode<synchronous>, transform_indices = @transform_4, window_bounds = array<i64: 128, 256>}, {pipeline_mode = #tpu.pipeline_mode<synchronous>, transform_indices = @transform_5, window_bounds = array<i64: 1, 256>}, {transform_indices = @transform_6, window_bounds = array<i64: 256, 256>}]} {
    %c0_i32 = arith.constant 0 : i32
    %0 = arith.cmpi eq, %arg0, %c0_i32 : i32
    %1 = arith.extui %0 : i1 to i32
    %c0_i32_0 = arith.constant 0 : i32
    %2 = arith.cmpi ne, %1, %c0_i32_0 : i32
    scf.if %2 {
      %c0 = arith.constant 0 : index
      %c0_2 = arith.constant 0 : index
      %6 = vector.load %arg2[%c0, %c0_2] : memref<256x256xf32, #tpu.memory_space<vmem>>, vector<256x256xf32>
      %7 = arith.truncf %6 : vector<256x256xf32> to vector<256x256xbf16>
      %c0_3 = arith.constant 0 : index
      %c0_4 = arith.constant 0 : index
      %8 = vector.load %arg3[%c0_3, %c0_4] : memref<256x128xbf16, #tpu.memory_space<vmem>>, vector<256x128xbf16>
      %cst = arith.constant dense<0.000000e+00> : vector<256x128xf32>
      %9 = tpu.matmul %7, %8, %cst {dimension_numbers = #tpu.dot_dimension_numbers<[1], [0], [0], [1], [0, 0, 1, 1], [], []>} : vector<256x256xbf16>, vector<256x128xbf16>, vector<256x128xf32> -> vector<256x128xf32>
      %c0_i32_5 = arith.constant 0 : i32
      %10 = arith.cmpi eq, %arg1, %c0_i32_5 : i32
      %11 = arith.extui %10 : i1 to i32
      %c0_i32_6 = arith.constant 0 : i32
      %12 = arith.cmpi ne, %11, %c0_i32_6 : i32
      scf.if %12 {
        %cst_19 = arith.constant 0.000000e+00 : f32
        %29 = vector.broadcast %cst_19 : f32 to vector<1x128xf32>
        %c0_20 = arith.constant 0 : index
        %c0_21 = arith.constant 0 : index
        %30 = vector.load %arg9[%c0_20, %c0_21] : memref<1x128xf32, #tpu.memory_space<vmem>>, vector<1x128xf32>
        tpu.vector_store %arg9[%c0_20, %c0_21], %29 {strides = array<i32>} : memref<1x128xf32, #tpu.memory_space<vmem>>, vector<1x128xf32>,
        %cst_22 = arith.constant 0.000000e+00 : f32
        %31 = vector.broadcast %cst_22 : f32 to vector<1x128xf32>
        %c0_23 = arith.constant 0 : index
        %c0_24 = arith.constant 0 : index
        %32 = vector.load %arg10[%c0_23, %c0_24] : memref<1x128xf32, #tpu.memory_space<vmem>>, vector<1x128xf32>
        tpu.vector_store %arg10[%c0_23, %c0_24], %31 {strides = array<i32>} : memref<1x128xf32, #tpu.memory_space<vmem>>, vector<1x128xf32>,
      } else {
      }
      %c0_7 = arith.constant 0 : index
      %c0_8 = arith.constant 0 : index
      %13 = vector.load %arg9[%c0_7, %c0_8] : memref<1x128xf32, #tpu.memory_space<vmem>>, vector<1x128xf32>
      %cst_9 = arith.constant dense<0.000000e+00> : vector<128xf32>
      %14 = vector.multi_reduction <add>, %9, %cst_9 [0] : vector<256x128xf32> to vector<128xf32>
      %15 = vector.shape_cast %14 : vector<128xf32> to vector<1x128xf32>
      %16 = arith.addf %13, %15 : vector<1x128xf32>
      %c0_10 = arith.constant 0 : index
      %c0_11 = arith.constant 0 : index
      %17 = vector.load %arg9[%c0_10, %c0_11] : memref<1x128xf32, #tpu.memory_space<vmem>>, vector<1x128xf32>
      tpu.vector_store %arg9[%c0_10, %c0_11], %16 {strides = array<i32>} : memref<1x128xf32, #tpu.memory_space<vmem>>, vector<1x128xf32>,
      %c0_12 = arith.constant 0 : index
      %c0_13 = arith.constant 0 : index
      %18 = vector.load %arg10[%c0_12, %c0_13] : memref<1x128xf32, #tpu.memory_space<vmem>>, vector<1x128xf32>
      %19 = arith.mulf %9, %9 : vector<256x128xf32>
      %cst_14 = arith.constant dense<0.000000e+00> : vector<128xf32>
      %20 = vector.multi_reduction <add>, %19, %cst_14 [0] : vector<256x128xf32> to vector<128xf32>
      %21 = vector.shape_cast %20 : vector<128xf32> to vector<1x128xf32>
      %22 = arith.addf %18, %21 : vector<1x128xf32>
      %c0_15 = arith.constant 0 : index
      %c0_16 = arith.constant 0 : index
      %23 = vector.load %arg10[%c0_15, %c0_16] : memref<1x128xf32, #tpu.memory_space<vmem>>, vector<1x128xf32>
      tpu.vector_store %arg10[%c0_15, %c0_16], %22 {strides = array<i32>} : memref<1x128xf32, #tpu.memory_space<vmem>>, vector<1x128xf32>,
      %24 = arith.truncf %9 : vector<256x128xf32> to vector<256x128xbf16>
      %25 = arith.index_cast %arg1 : i32 to index
      %c0_17 = arith.constant 0 : index
      %c0_18 = arith.constant 0 : index
      %26 = vector.load %arg11[%25, %c0_17, %c0_18] : memref<1x256x128xbf16, #tpu.memory_space<vmem>>, vector<1x256x128xbf16>
      %27 = vector.shape_cast %26 : vector<1x256x128xbf16> to vector<256x128xbf16>
      %28 = vector.shape_cast %24 : vector<256x128xbf16> to vector<1x256x128xbf16>
      tpu.vector_store %arg11[%25, %c0_17, %c0_18], %28 {strides = array<i32>} : memref<1x256x128xbf16, #tpu.memory_space<vmem>>, vector<1x256x128xbf16>,
    } else {
    }
    %c1_i32 = arith.constant 1 : i32
    %3 = arith.cmpi eq, %arg0, %c1_i32 : i32
    %4 = arith.extui %3 : i1 to i32
    %c0_i32_1 = arith.constant 0 : i32
    %5 = arith.cmpi ne, %4, %c0_i32_1 : i32
    scf.if %5 {
      %c0_i32_2 = arith.constant 0 : i32
      %6 = arith.cmpi eq, %arg1, %c0_i32_2 : i32
      %7 = arith.extui %6 : i1 to i32
      %c0_i32_3 = arith.constant 0 : i32
      %8 = arith.cmpi ne, %7, %c0_i32_3 : i32
      scf.if %8 {
        %c0_16 = arith.constant 0 : index
        %c0_17 = arith.constant 0 : index
        %28 = vector.load %arg9[%c0_16, %c0_17] : memref<1x128xf32, #tpu.memory_space<vmem>>, vector<1x128xf32>
        %cst_18 = arith.constant 3.906250e-03 : f32
        %29 = vector.broadcast %cst_18 : f32 to vector<1x128xf32>
        %30 = arith.mulf %28, %29 : vector<1x128xf32>
        %c0_19 = arith.constant 0 : index
        %c0_20 = arith.constant 0 : index
        %31 = vector.load %arg10[%c0_19, %c0_20] : memref<1x128xf32, #tpu.memory_space<vmem>>, vector<1x128xf32>
        %cst_21 = arith.constant 3.906250e-03 : f32
        %32 = vector.broadcast %cst_21 : f32 to vector<1x128xf32>
        %33 = arith.mulf %31, %32 : vector<1x128xf32>
        %34 = arith.mulf %30, %30 : vector<1x128xf32>
        %35 = arith.subf %33, %34 : vector<1x128xf32>
        %cst_22 = arith.constant 0.000000e+00 : f32
        %36 = vector.broadcast %cst_22 : f32 to vector<1x128xf32>
        %37 = arith.maximumf %35, %36 : vector<1x128xf32>
        %cst_23 = arith.constant 9.99999974E-6 : f32
        %38 = vector.broadcast %cst_23 : f32 to vector<1x128xf32>
        %39 = arith.addf %37, %38 : vector<1x128xf32>
        %40 = math.rsqrt %39 : vector<1x128xf32>
        %c0_24 = arith.constant 0 : index
        %c0_25 = arith.constant 0 : index
        %41 = vector.load %arg4[%c0_24, %c0_25] : memref<1x128xf32, #tpu.memory_space<vmem>>, vector<1x128xf32>
        %42 = arith.mulf %41, %40 : vector<1x128xf32>
        %c0_26 = arith.constant 0 : index
        %c0_27 = arith.constant 0 : index
        %43 = vector.load %arg9[%c0_26, %c0_27] : memref<1x128xf32, #tpu.memory_space<vmem>>, vector<1x128xf32>
        tpu.vector_store %arg9[%c0_26, %c0_27], %42 {strides = array<i32>} : memref<1x128xf32, #tpu.memory_space<vmem>>, vector<1x128xf32>,
        %c0_28 = arith.constant 0 : index
        %c0_29 = arith.constant 0 : index
        %44 = vector.load %arg5[%c0_28, %c0_29] : memref<1x128xf32, #tpu.memory_space<vmem>>, vector<1x128xf32>
        %45 = arith.mulf %30, %42 : vector<1x128xf32>
        %46 = arith.subf %44, %45 : vector<1x128xf32>
        %c0_30 = arith.constant 0 : index
        %c0_31 = arith.constant 0 : index
        %47 = vector.load %arg10[%c0_30, %c0_31] : memref<1x128xf32, #tpu.memory_space<vmem>>, vector<1x128xf32>
        tpu.vector_store %arg10[%c0_30, %c0_31], %46 {strides = array<i32>} : memref<1x128xf32, #tpu.memory_space<vmem>>, vector<1x128xf32>,
      } else {
      }
      %9 = arith.index_cast %arg1 : i32 to index
      %c0 = arith.constant 0 : index
      %c0_4 = arith.constant 0 : index
      %10 = vector.load %arg11[%9, %c0, %c0_4] : memref<1x256x128xbf16, #tpu.memory_space<vmem>>, vector<1x256x128xbf16>
      %11 = vector.shape_cast %10 : vector<1x256x128xbf16> to vector<256x128xbf16>
      %12 = arith.extf %11 : vector<256x128xbf16> to vector<256x128xf32>
      %c0_5 = arith.constant 0 : index
      %c0_6 = arith.constant 0 : index
      %13 = vector.load %arg9[%c0_5, %c0_6] : memref<1x128xf32, #tpu.memory_space<vmem>>, vector<1x128xf32>
      %14 = vector.broadcast %13 : vector<1x128xf32> to vector<256x128xf32>
      %15 = arith.mulf %12, %14 : vector<256x128xf32>
      %c0_7 = arith.constant 0 : index
      %c0_8 = arith.constant 0 : index
      %16 = vector.load %arg10[%c0_7, %c0_8] : memref<1x128xf32, #tpu.memory_space<vmem>>, vector<1x128xf32>
      %17 = vector.broadcast %16 : vector<1x128xf32> to vector<256x128xf32>
      %18 = arith.addf %15, %17 : vector<256x128xf32>
      %cst = arith.constant 0.000000e+00 : f32
      %19 = vector.broadcast %cst : f32 to vector<256x128xf32>
      %20 = arith.maximumf %18, %19 : vector<256x128xf32>
      %21 = arith.truncf %20 : vector<256x128xf32> to vector<256x128xbf16>
      %c0_9 = arith.constant 0 : index
      %c0_10 = arith.constant 0 : index
      %22 = vector.load %arg6[%c0_9, %c0_10] : memref<128x256xbf16, #tpu.memory_space<vmem>>, vector<128x256xbf16>
      %cst_11 = arith.constant dense<0.000000e+00> : vector<256x256xf32>
      %23 = tpu.matmul %21, %22, %cst_11 {dimension_numbers = #tpu.dot_dimension_numbers<[1], [0], [0], [1], [0, 0, 1, 1], [], []>} : vector<256x128xbf16>, vector<128x256xbf16>, vector<256x256xf32> -> vector<256x256xf32>
      %c0_12 = arith.constant 0 : index
      %c0_13 = arith.constant 0 : index
      %24 = vector.load %arg7[%c0_12, %c0_13] : memref<1x256xf32, #tpu.memory_space<vmem>>, vector<1x256xf32>
      %25 = vector.broadcast %24 : vector<1x256xf32> to vector<256x256xf32>
      %26 = arith.addf %23, %25 : vector<256x256xf32>
      %c0_14 = arith.constant 0 : index
      %c0_15 = arith.constant 0 : index
      %27 = vector.load %arg8[%c0_14, %c0_15] : memref<256x256xf32, #tpu.memory_space<vmem>>, vector<256x256xf32>
      tpu.vector_store %arg8[%c0_14, %c0_15], %26 {strides = array<i32>} : memref<256x256xf32, #tpu.memory_space<vmem>>, vector<256x256xf32>,
    } else {
    }
    return
  }
  func.func @transform_0(%arg0: i32, %arg1: i32) -> (i32, i32) {
    %c1_i32 = arith.constant 1 : i32
    %0 = arith.subi %c1_i32, %arg0 : i32
    %1 = arith.muli %0, %arg1 : i32
    %c0_i32 = arith.constant 0 : i32
    %2 = arith.muli %arg0, %c0_i32 : i32
    %3 = arith.addi %1, %2 : i32
    %c0_i32_0 = arith.constant 0 : i32
    %c0_i32_1 = arith.constant 0 : i32
    return %3, %c0_i32_0 : i32, i32
  }
  func.func @transform_1(%arg0: i32, %arg1: i32) -> (i32, i32) {
    %c0_i32 = arith.constant 0 : i32
    %c0_i32_0 = arith.constant 0 : i32
    %c0_i32_1 = arith.constant 0 : i32
    return %c0_i32, %c0_i32_0 : i32, i32
  }
  func.func @transform_2(%arg0: i32, %arg1: i32) -> (i32, i32) {
    %c0_i32 = arith.constant 0 : i32
    %c0_i32_0 = arith.constant 0 : i32
    %c0_i32_1 = arith.constant 0 : i32
    return %c0_i32, %c0_i32_0 : i32, i32
  }
  func.func @transform_3(%arg0: i32, %arg1: i32) -> (i32, i32) {
    %c0_i32 = arith.constant 0 : i32
    %c0_i32_0 = arith.constant 0 : i32
    %c0_i32_1 = arith.constant 0 : i32
    return %c0_i32, %c0_i32_0 : i32, i32
  }
  func.func @transform_4(%arg0: i32, %arg1: i32) -> (i32, i32) {
    %c0_i32 = arith.constant 0 : i32
    %c0_i32_0 = arith.constant 0 : i32
    %c0_i32_1 = arith.constant 0 : i32
    return %c0_i32, %c0_i32_0 : i32, i32
  }
  func.func @transform_5(%arg0: i32, %arg1: i32) -> (i32, i32) {
    %c0_i32 = arith.constant 0 : i32
    %c0_i32_0 = arith.constant 0 : i32
    %c0_i32_1 = arith.constant 0 : i32
    return %c0_i32, %c0_i32_0 : i32, i32
  }
  func.func @transform_6(%arg0: i32, %arg1: i32) -> (i32, i32) {
    %0 = arith.muli %arg0, %arg1 : i32
    %c0_i32 = arith.constant 0 : i32
    %c0_i32_0 = arith.constant 0 : i32
    return %0, %c0_i32 : i32, i32
  }
}

</mosaic_0001>

<llo_original>
// kernel: tpu_custom_call.1
$region0: #{tpu_custom_call.1}
  #allocation0 [shape = 'u32[]', space=smem, size = 0x4, offset = 0x4, fixed_abs, tag = 'smem constant byte address 0x4 - core index']
  #allocation1 [shape = 'u32[144,128]{1,0:T(1,128)}', space=vmem, size = 0x12000, scoped, tag = 'internal scratch']
  #allocation2 [shape = 'f32[1,128]{1,0:T(1,128)}', space=vmem, size = 0x200, scoped, tag = 'scratch operand']
  #allocation3 [shape = 'f32[1,128]{1,0:T(1,128)}', space=vmem, size = 0x200, scoped, tag = 'scratch operand']
  #allocation4 [shape = 'bf16[1,256,128]{2,1,0:T(16,128)(2,1)}', space=vmem, size = 0x10000, scoped, tag = 'scratch operand']
  %s0 = inlined_call_operand.hbm [shape: f32[256,256], index: 0, kind: input, shape index: {}]
  %s1 = inlined_call_operand.hbm [shape: bf16[256,128], index: 1, kind: input, shape index: {}]
  %s2 = inlined_call_operand.vmem [shape: f32[1,128], index: 2, kind: input, shape index: {}]
  %s3 = inlined_call_operand.vmem [shape: f32[1,128], index: 3, kind: input, shape index: {}]
  %s4 = inlined_call_operand.hbm [shape: bf16[128,256], index: 4, kind: input, shape index: {}]
  %s5 = inlined_call_operand.vmem [shape: f32[1,256], index: 5, kind: input, shape index: {}]
  %s6 = inlined_call_operand.hbm [shape: f32[256,256], index: 6, kind: output, shape index: {}]
  %s7 = sld [smem:[#allocation0]]
  $region85: #{tpu_custom_call.1} parent=0
    _
  %s9 = ssub.s32 1, %s7
  %s10 = scalar_select 0, %s9, %s7
  $region1: #{tpu_custom_call.1} parent=0
    #allocation5 [shape = 'u8[524288]{0}', space=vmem, size = 0x80000, scoped, tag = 'input window, operand 0']
    #allocation6 [shape = 's32[2]{0}', space=sflag, size = 0x8, scoped, tag = 'scoped memory for tpu_custom_call.1']
    #allocation7 [shape = 's32[2]{0}', space=sflag, size = 0x8, scoped, tag = 'scoped memory for tpu_custom_call.1']
    #allocation8 [shape = 'u8[65536]{0}', space=vmem, size = 0x10000, scoped, tag = 'input window, operand 1, single buffered']
    #allocation9 [shape = 's32[1]{0}', space=sflag, size = 0x4, scoped, tag = 'scoped memory for tpu_custom_call.1']
    #allocation10 [shape = 'u8[65536]{0}', space=vmem, size = 0x10000, scoped, tag = 'input window, operand 4, single buffered']
    #allocation11 [shape = 'u8[524288]{0}', space=vmem, size = 0x80000, scoped, tag = 'output window, operand 0']
    %11 = vsyncpa [#allocation6], 0
    %s12 = scalar_lea.sflag [#allocation6], 1
    %13 = vsyncpa %s12, 0
    %14 = vsyncpa [#allocation9], 0
    %15 = vsyncpa [#allocation7], 0
    %s16 = scalar_lea.sflag [#allocation7], 1
    %17 = vsyncpa %s16, 0
    loop: start=0, step=1, limit=4
    $region2: #{tpu_custom_call.1} parent=1 // loop_pre_header
      _
    $region3: #{tpu_custom_call.1} parent=1 // loop_header
      %s19 = sphi 0, %s23
      %p20 = scmp.ge.s32.totalorder %s19, 4
      %s26 = sphi 0, %s38
      %s27 = sphi 0, %s34
      %s28 = sphi 0, %s26
      %s29 = sphi 0, %s27
      %s30 = sphi 0, %s28
      %s31 = sphi 0, %s29
      %s45 = sphi 0, %s47
      %s48 = sphi 0, %s45
      %s49 = sphi 0, %s48
      %s65 = sphi 0, %s49
      %s69 = sphi 0, %s69
      %s71 = sphi 0, %s69
      %s72 = sphi 0, %s71
      %s86 = sphi 0, %s72
      %s90 = sphi 0, %s90
      %s92 = sphi 0, %s90
      %s93 = sphi 0, %s92
      %s107 = sphi 0, %s93
      %s111 = sphi 0, %s111
      %s113 = sphi 0, %s111
      %s114 = sphi 0, %s113
      %s128 = sphi 0, %s114
      %s132 = sphi 0, %s132
      %s134 = sphi 0, %s132
      %s135 = sphi 0, %s134
      %s149 = sphi 0, %s135
      %s153 = sphi 0, %s153
      %s155 = sphi 0, %s153
      %s156 = sphi 0, %s155
      %s170 = sphi 0, %s156
      %s178 = sphi 0, %s180
      %s181 = sphi 0, %s178
      %s182 = sphi 0, %s181
      %s198 = sphi 0, %s182
    $region4: #{tpu_custom_call.1} parent=1 // loop_header_branch
      %22 = sbr.rel (%p20) target = $region8
    $region5: #{tpu_custom_call.1} parent=1 // loop_body
      %s24 = ssub.s32 %s19, 1
      %s25 = ssub.s32 %s19, 2
      %s32 = sadd.s32 1, %s27
      %p33 = scmp.ge.s32.totalorder %s32, 1
      %s34 = scalar_select %p33, 0, %s32
      %s35 = sadd.s32 1, %s26
      %s36 = scalar_select %p33, %s35, %s26
      %p37 = scmp.ge.s32.totalorder %s36, 2
      %s38 = scalar_select %p37, 0, %s36
      %s39 = ssub.s32 1, %s26
      %s40 = smul.u32 %s39, %s27
      %s41 = ssub.s32 1, %s38
      %s42 = smul.u32 %s41, %s34
      %s43 = ssub.s32 %s40, %s42
      %p44 = scmp.eq.s32.totalorder %s43, 0
      %s46 = sadd.s32 %s45, 1
      %s47 = scalar_select %p44, %s45, %s46
      %p50 = pneg %p44
      %p51 = scmp.eq.s32.totalorder %s19, 1
      %p52 = por %p50, %p51
      %p53 = scmp.ne.s32.totalorder %s45, %s48
      %p54 = scmp.eq.s32.totalorder %s19, 0
      %p55 = por %p53, %p54
      %p56 = scmp.ne.s32.totalorder %s45, %s48
      %p57 = scmp.eq.s32.totalorder %s24, 1
      %p58 = por %p56, %p57
      %p59 = scmp.ne.s32.totalorder %s48, %s49
      %p60 = scmp.eq.s32.totalorder %s24, 0
      %p61 = por %p59, %p60
      %p62 = scmp.ne.s32.totalorder %s48, %s49
      %p63 = scmp.eq.s32.totalorder %s25, 1
      %p64 = por %p62, %p63
      %p66 = scmp.ne.s32.totalorder %s49, %s65
      %p67 = scmp.eq.s32.totalorder %s25, 0
      %p68 = por %p66, %p67
      %s70 = sadd.s32 %s69, 1
      %p73 = scmp.eq.s32.totalorder %s19, 1
      %p74 = scmp.ne.s32.totalorder %s69, %s71
      %p75 = scmp.eq.s32.totalorder %s19, 0
      %p76 = por %p74, %p75
      %p77 = scmp.ne.s32.totalorder %s69, %s71
      %p78 = scmp.eq.s32.totalorder %s24, 1
      %p79 = por %p77, %p78
      %p80 = scmp.ne.s32.totalorder %s71, %s72
      %p81 = scmp.eq.s32.totalorder %s24, 0
      %p82 = por %p80, %p81
      %p83 = scmp.ne.s32.totalorder %s71, %s72
      %p84 = scmp.eq.s32.totalorder %s25, 1
      %p85 = por %p83, %p84
      %p87 = scmp.ne.s32.totalorder %s72, %s86
      %p88 = scmp.eq.s32.totalorder %s25, 0
      %p89 = por %p87, %p88
      %s91 = sadd.s32 %s90, 1
      %p94 = scmp.eq.s32.totalorder %s19, 1
      %p95 = scmp.ne.s32.totalorder %s90, %s92
      %p96 = scmp.eq.s32.totalorder %s19, 0
      %p97 = por %p95, %p96
      %p98 = scmp.ne.s32.totalorder %s90, %s92
      %p99 = scmp.eq.s32.totalorder %s24, 1
      %p100 = por %p98, %p99
      %p101 = scmp.ne.s32.totalorder %s92, %s93
      %p102 = scmp.eq.s32.totalorder %s24, 0
      %p103 = por %p101, %p102
      %p104 = scmp.ne.s32.totalorder %s92, %s93
      %p105 = scmp.eq.s32.totalorder %s25, 1
      %p106 = por %p104, %p105
      %p108 = scmp.ne.s32.totalorder %s93, %s107
      %p109 = scmp.eq.s32.totalorder %s25, 0
      %p110 = por %p108, %p109
      %s112 = sadd.s32 %s111, 1
      %p115 = scmp.eq.s32.totalorder %s19, 1
      %p116 = scmp.ne.s32.totalorder %s111, %s113
      %p117 = scmp.eq.s32.totalorder %s19, 0
      %p118 = por %p116, %p117
      %p119 = scmp.ne.s32.totalorder %s111, %s113
      %p120 = scmp.eq.s32.totalorder %s24, 1
      %p121 = por %p119, %p120
      %p122 = scmp.ne.s32.totalorder %s113, %s114
      %p123 = scmp.eq.s32.totalorder %s24, 0
      %p124 = por %p122, %p123
      %p125 = scmp.ne.s32.totalorder %s113, %s114
      %p126 = scmp.eq.s32.totalorder %s25, 1
      %p127 = por %p125, %p126
      %p129 = scmp.ne.s32.totalorder %s114, %s128
      %p130 = scmp.eq.s32.totalorder %s25, 0
      %p131 = por %p129, %p130
      %s133 = sadd.s32 %s132, 1
      %p136 = scmp.eq.s32.totalorder %s19, 1
      %p137 = scmp.ne.s32.totalorder %s132, %s134
      %p138 = scmp.eq.s32.totalorder %s19, 0
      %p139 = por %p137, %p138
      %p140 = scmp.ne.s32.totalorder %s132, %s134
      %p141 = scmp.eq.s32.totalorder %s24, 1
      %p142 = por %p140, %p141
      %p143 = scmp.ne.s32.totalorder %s134, %s135
      %p144 = scmp.eq.s32.totalorder %s24, 0
      %p145 = por %p143, %p144
      %p146 = scmp.ne.s32.totalorder %s134, %s135
      %p147 = scmp.eq.s32.totalorder %s25, 1
      %p148 = por %p146, %p147
      %p150 = scmp.ne.s32.totalorder %s135, %s149
      %p151 = scmp.eq.s32.totalorder %s25, 0
      %p152 = por %p150, %p151
      %s154 = sadd.s32 %s153, 1
      %p157 = scmp.eq.s32.totalorder %s19, 1
      %p158 = scmp.ne.s32.totalorder %s153, %s155
      %p159 = scmp.eq.s32.totalorder %s19, 0
      %p160 = por %p158, %p159
      %p161 = scmp.ne.s32.totalorder %s153, %s155
      %p162 = scmp.eq.s32.totalorder %s24, 1
      %p163 = por %p161, %p162
      %p164 = scmp.ne.s32.totalorder %s155, %s156
      %p165 = scmp.eq.s32.totalorder %s24, 0
      %p166 = por %p164, %p165
      %p167 = scmp.ne.s32.totalorder %s155, %s156
      %p168 = scmp.eq.s32.totalorder %s25, 1
      %p169 = por %p167, %p168
      %p171 = scmp.ne.s32.totalorder %s156, %s170
      %p172 = scmp.eq.s32.totalorder %s25, 0
      %p173 = por %p171, %p172
      %s174 = smul.u32 %s26, %s27
      %s175 = smul.u32 %s38, %s34
      %s176 = ssub.s32 %s174, %s175
      %p177 = scmp.eq.s32.totalorder %s176, 0
      %s179 = sadd.s32 %s178, 1
      %s180 = scalar_select %p177, %s178, %s179
      %p183 = pneg %p177
      %p184 = scmp.eq.s32.totalorder %s19, 1
      %p185 = por %p183, %p184
      %p186 = scmp.ne.s32.totalorder %s178, %s181
      %p187 = scmp.eq.s32.totalorder %s19, 0
      %p188 = por %p186, %p187
      %p189 = scmp.ne.s32.totalorder %s178, %s181
      %p190 = scmp.eq.s32.totalorder %s24, 1
      %p191 = por %p189, %p190
      %p192 = scmp.ne.s32.totalorder %s181, %s182
      %p193 = scmp.eq.s32.totalorder %s24, 0
      %p194 = por %p192, %p193
      %p195 = scmp.ne.s32.totalorder %s181, %s182
      %p196 = scmp.eq.s32.totalorder %s25, 1
      %p197 = por %p195, %p196
      %p199 = scmp.ne.s32.totalorder %s182, %s198
      %p200 = scmp.eq.s32.totalorder %s25, 0
      %p201 = por %p199, %p200
      %p202 = scmp.le.s32.totalorder 1, %s19
      %p203 = scmp.lt.s32.totalorder %s19, 3
      %p204 = pnand %p202, %p203
      %p205 = pneg %p204
      // Predicated region
      $region9: #{tpu_custom_call.1} parent=5 // pred_check
        _
      $region10: #{tpu_custom_call.1} parent=5 // pred_check_branch
        %207 = sbr.rel (%p204) target = $region12
      $region11: #{tpu_custom_call.1} parent=5 // pred_region
        %s208 = ssub.s32 %s19, 1
        // Predicated region
        $region13: #{tpu_custom_call.1} parent=11 // pred_check
          %p209 = pneg %p82
        $region14: #{tpu_custom_call.1} parent=11 // pred_check_branch
          %211 = sbr.rel (%p209) target = $region16
        $region15: #{tpu_custom_call.1} parent=11 // pred_region
          %s213 = ssub.s32 2048, 2048
          %214 = vsyncadd [#allocation9], %s213
          %s215 = sshll.u32 [#allocation8], 4
          %s216 = int_to_ptr.vmem [resolvable:$true] %s215
          %221 = dma.hbm_to_vmem [thread:$0]  %s1, 2048, %s216, [#allocation9], 64, 64, 4
        $region16: #{tpu_custom_call.1} parent=11 // pred_fallthru
          _
        // Predicated region
        $region17: #{tpu_custom_call.1} parent=11 // pred_check
          %p222 = pneg %p103
        $region18: #{tpu_custom_call.1} parent=11 // pred_check_branch
          %224 = sbr.rel (%p222) target = $region20
        $region19: #{tpu_custom_call.1} parent=11 // pred_region
          _
        $region20: #{tpu_custom_call.1} parent=11 // pred_fallthru
          _
        // Predicated region
        $region21: #{tpu_custom_call.1} parent=11 // pred_check
          %p225 = pneg %p124
        $region22: #{tpu_custom_call.1} parent=11 // pred_check_branch
          %227 = sbr.rel (%p225) target = $region24
        $region23: #{tpu_custom_call.1} parent=11 // pred_region
          _
        $region24: #{tpu_custom_call.1} parent=11 // pred_fallthru
          _
        // Predicated region
        $region25: #{tpu_custom_call.1} parent=11 // pred_check
          %p228 = pneg %p145
        $region26: #{tpu_custom_call.1} parent=11 // pred_check_branch
          %230 = sbr.rel (%p228) target = $region28
        $region27: #{tpu_custom_call.1} parent=11 // pred_region
          %s232 = ssub.s32 2048, 2048
          %233 = vsyncadd [#allocation9], %s232
          %s234 = sshll.u32 [#allocation10], 4
          %s235 = int_to_ptr.vmem [resolvable:$true] %s234
          %240 = dma.hbm_to_vmem [thread:$0]  %s4, 2048, %s235, [#allocation9], 128, 128, 8
        $region28: #{tpu_custom_call.1} parent=11 // pred_fallthru
          _
        // Predicated region
        $region29: #{tpu_custom_call.1} parent=11 // pred_check
          %p241 = pneg %p166
        $region30: #{tpu_custom_call.1} parent=11 // pred_check_branch
          %243 = sbr.rel (%p241) target = $region32
        $region31: #{tpu_custom_call.1} parent=11 // pred_region
          _
        $region32: #{tpu_custom_call.1} parent=11 // pred_fallthru
          _
      $region12: #{tpu_custom_call.1} parent=5 // pred_fallthru
        _
      %p244 = scmp.lt.s32.totalorder %s19, 2
      // Predicated region
      $region33: #{tpu_custom_call.1} parent=5 // pred_check
        %p245 = pneg %p244
      $region34: #{tpu_custom_call.1} parent=5 // pred_check_branch
        %247 = sbr.rel (%p245) target = $region36
      $region35: #{tpu_custom_call.1} parent=5 // pred_region
        // Predicated region
        $region37: #{tpu_custom_call.1} parent=35 // pred_check
          %p248 = pneg %p55
        $region38: #{tpu_custom_call.1} parent=35 // pred_check_branch
          %250 = sbr.rel (%p248) target = $region40
        $region39: #{tpu_custom_call.1} parent=35 // pred_region
          %s251 = sand.u32 %s45, 1
          %s252 = scalar_lea.sflag [#allocation6], %s251
          %s253 = sand.u32 %s45, 1
          %s254 = smul.addr %s253, 512
          %s255 = scalar_lea.vmem [#allocation5], %s254
          %s256 = ssub.s32 1, %s26
          %s257 = smul.u32 %s256, %s27
          %s258 = smul.u32 32, %s257
          %s260 = ssub.s32 8192, 8192
          %261 = vsyncadd %s252, %s260
          %s262 = smul.addr %s258, 2
          %s263 = smul.addr %s262, 128
          %s264 = scalar_lea.hbm %s0, %s263
          %s265 = sshll.u32 %s255, 4
          %s266 = int_to_ptr.vmem [resolvable:$true] %s265
          %271 = dma.hbm_to_vmem [thread:$0]  %s264, 8192, %s266, %s252, 256, 256, 16
        $region40: #{tpu_custom_call.1} parent=35 // pred_fallthru
          _
      $region36: #{tpu_custom_call.1} parent=5 // pred_fallthru
        _
      %p272 = scmp.le.s32.totalorder 1, %s19
      %p273 = scmp.lt.s32.totalorder %s19, 3
      %p274 = pnand %p272, %p273
      %p275 = pneg %p274
      // Predicated region
      $region41: #{tpu_custom_call.1} parent=5 // pred_check
        _
      $region42: #{tpu_custom_call.1} parent=5 // pred_check_branch
        %277 = sbr.rel (%p274) target = $region44
      $region43: #{tpu_custom_call.1} parent=5 // pred_region
        %s278 = ssub.s32 %s19, 1
        %s279 = sand.u32 %s48, 1
        %s280 = scalar_lea.sflag [#allocation6], %s279
        %s281 = sand.u32 %s48, 1
        %s282 = smul.addr %s281, 512
        %s283 = scalar_lea.vmem [#allocation5], %s282
        // Predicated region
        $region45: #{tpu_custom_call.1} parent=43 // pred_check
          %p284 = pneg %p61
        $region46: #{tpu_custom_call.1} parent=43 // pred_check_branch
          %286 = sbr.rel (%p284) target = $region48
        $region47: #{tpu_custom_call.1} parent=43 // pred_region
          %287 = dma.done %s280, 8192
        $region48: #{tpu_custom_call.1} parent=43 // pred_fallthru
          _
        // Predicated region
        $region49: #{tpu_custom_call.1} parent=43 // pred_check
          %p288 = pneg %p82
        $region50: #{tpu_custom_call.1} parent=43 // pred_check_branch
          %290 = sbr.rel (%p288) target = $region52
        $region51: #{tpu_custom_call.1} parent=43 // pred_region
          %291 = dma.done [#allocation9], 2048
        $region52: #{tpu_custom_call.1} parent=43 // pred_fallthru
          _
        // Predicated region
        $region53: #{tpu_custom_call.1} parent=43 // pred_check
          %p292 = pneg %p145
        $region54: #{tpu_custom_call.1} parent=43 // pred_check_branch
          %294 = sbr.rel (%p292) target = $region56
        $region55: #{tpu_custom_call.1} parent=43 // pred_region
          %295 = dma.done [#allocation9], 2048
        $region56: #{tpu_custom_call.1} parent=43 // pred_fallthru
          _
        %s296 = sand.u32 %s48, 1
        %s297 = scalar_lea.sflag [#allocation6], %s296
        %s298 = sand.u32 %s48, 1
        %s299 = smul.addr %s298, 512
        %s300 = scalar_lea.vmem [#allocation5], %s299
        %p301 = pneg %p61
        %p302 = pneg %p58
        %p303 = pneg %p82
        %p304 = pneg %p79
        %p305 = pneg %p103
        %p306 = pneg %p100
        %p307 = pneg %p124
        %p308 = pneg %p121
        %p309 = pneg %p145
        %p310 = pneg %p142
        %p311 = pneg %p166
        %p312 = pneg %p163
        %p313 = pneg %p194
        %p314 = pneg %p191
        %s315 = sand.u32 %s181, 1
        %s316 = scalar_lea.sflag [#allocation7], %s315
        %s317 = sand.u32 %s181, 1
        %s318 = smul.addr %s317, 512
        %s319 = scalar_lea.vmem [#allocation11], %s318
        %s320 = ssub.s32 1, %s28
        %s321 = smul.u32 %s320, %s29
        %s322 = smul.u32 32, %s321
        %s323 = smul.u32 %s28, %s29
        %s324 = smul.u32 32, %s323
        %p326 = scmp.eq.s32.totalorder %s28, 0
        // Predicated region
        $region57: #{tpu_custom_call.1} parent=43 // pred_check
          %p327 = pneg %p326
        $region58: #{tpu_custom_call.1} parent=43 // pred_check_branch
          %329 = sbr.rel (%p327) target = $region60
        $region59: #{tpu_custom_call.1} parent=43 // pred_region
          %v330 = vld [vmem:[%s283] sm:$0xff]
          %v331 = vld [vmem:[%s283 + $0x8] sm:$0xff]
          %v332 = vld [vmem:[%s283 + $0x10] sm:$0xff]
          %v333 = vld [vmem:[%s283 + $0x18] sm:$0xff]
          %v334 = vld [vmem:[%s283 + $0x20] sm:$0xff]
          %v335 = vld [vmem:[%s283 + $0x28] sm:$0xff]
          %v336 = vld [vmem:[%s283 + $0x30] sm:$0xff]
          %v337 = vld [vmem:[%s283 + $0x38] sm:$0xff]
          %v338 = vld [vmem:[%s283 + $0x40] sm:$0xff]
          %v339 = vld [vmem:[%s283 + $0x48] sm:$0xff]
          %v340 = vld [vmem:[%s283 + $0x50] sm:$0xff]
          %v341 = vld [vmem:[%s283 + $0x58] sm:$0xff]
          %v342 = vld [vmem:[%s283 + $0x60] sm:$0xff]
          %v343 = vld [vmem:[%s283 + $0x68] sm:$0xff]
          %v344 = vld [vmem:[%s283 + $0x70] sm:$0xff]
          %v345 = vld [vmem:[%s283 + $0x78] sm:$0xff]
          %v346 = vld [vmem:[%s283 + $0x80] sm:$0xff]
          %v347 = vld [vmem:[%s283 + $0x88] sm:$0xff]
          %v348 = vld [vmem:[%s283 + $0x90] sm:$0xff]
          %v349 = vld [vmem:[%s283 + $0x98] sm:$0xff]
          %v350 = vld [vmem:[%s283 + $0xa0] sm:$0xff]
          %v351 = vld [vmem:[%s283 + $0xa8] sm:$0xff]
          %v352 = vld [vmem:[%s283 + $0xb0] sm:$0xff]
          %v353 = vld [vmem:[%s283 + $0xb8] sm:$0xff]
          %v354 = vld [vmem:[%s283 + $0xc0] sm:$0xff]
          %v355 = vld [vmem:[%s283 + $0xc8] sm:$0xff]
          %v356 = vld [vmem:[%s283 + $0xd0] sm:$0xff]
          %v357 = vld [vmem:[%s283 + $0xd8] sm:$0xff]
          %v358 = vld [vmem:[%s283 + $0xe0] sm:$0xff]
          %v359 = vld [vmem:[%s283 + $0xe8] sm:$0xff]
          %v360 = vld [vmem:[%s283 + $0xf0] sm:$0xff]
          %v361 = vld [vmem:[%s283 + $0xf8] sm:$0xff]
          %v362 = vld [vmem:[%s283 + $0x100] sm:$0xff]
          %v363 = vld [vmem:[%s283 + $0x108] sm:$0xff]
          %v364 = vld [vmem:[%s283 + $0x110] sm:$0xff]
          %v365 = vld [vmem:[%s283 + $0x118] sm:$0xff]
          %v366 = vld [vmem:[%s283 + $0x120] sm:$0xff]
          %v367 = vld [vmem:[%s283 + $0x128] sm:$0xff]
          %v368 = vld [vmem:[%s283 + $0x130] sm:$0xff]
          %v369 = vld [vmem:[%s283 + $0x138] sm:$0xff]
          %v370 = vld [vmem:[%s283 + $0x140] sm:$0xff]
          %v371 = vld [vmem:[%s283 + $0x148] sm:$0xff]
          %v372 = vld [vmem:[%s283 + $0x150] sm:$0xff]
          %v373 = vld [vmem:[%s283 + $0x158] sm:$0xff]
          %v374 = vld [vmem:[%s283 + $0x160] sm:$0xff]
          %v375 = vld [vmem:[%s283 + $0x168] sm:$0xff]
          %v376 = vld [vmem:[%s283 + $0x170] sm:$0xff]
          %v377 = vld [vmem:[%s283 + $0x178] sm:$0xff]
          %v378 = vld [vmem:[%s283 + $0x180] sm:$0xff]
          %v379 = vld [vmem:[%s283 + $0x188] sm:$0xff]
          %v380 = vld [vmem:[%s283 + $0x190] sm:$0xff]
          %v381 = vld [vmem:[%s283 + $0x198] sm:$0xff]
          %v382 = vld [vmem:[%s283 + $0x1a0] sm:$0xff]
          %v383 = vld [vmem:[%s283 + $0x1a8] sm:$0xff]
          %v384 = vld [vmem:[%s283 + $0x1b0] sm:$0xff]
          %v385 = vld [vmem:[%s283 + $0x1b8] sm:$0xff]
          %v386 = vld [vmem:[%s283 + $0x1c0] sm:$0xff]
          %v387 = vld [vmem:[%s283 + $0x1c8] sm:$0xff]
          %v388 = vld [vmem:[%s283 + $0x1d0] sm:$0xff]
          %v389 = vld [vmem:[%s283 + $0x1d8] sm:$0xff]
          %v390 = vld [vmem:[%s283 + $0x1e0] sm:$0xff]
          %v391 = vld [vmem:[%s283 + $0x1e8] sm:$0xff]
          %v392 = vld [vmem:[%s283 + $0x1f0] sm:$0xff]
          %v393 = vld [vmem:[%s283 + $0x1f8] sm:$0xff]
          %v394 = vpack.c.bf16 %v332, %v330
          %v395 = vpack.c.bf16 %v333, %v331
          %v396 = vpack.c.bf16 %v336, %v334
          %v397 = vpack.c.bf16 %v337, %v335
          %v398 = vpack.c.bf16 %v340, %v338
          %v399 = vpack.c.bf16 %v341, %v339
          %v400 = vpack.c.bf16 %v344, %v342
          %v401 = vpack.c.bf16 %v345, %v343
          %v402 = vpack.c.bf16 %v348, %v346
          %v403 = vpack.c.bf16 %v349, %v347
          %v404 = vpack.c.bf16 %v352, %v350
          %v405 = vpack.c.bf16 %v353, %v351
          %v406 = vpack.c.bf16 %v356, %v354
          %v407 = vpack.c.bf16 %v357, %v355
          %v408 = vpack.c.bf16 %v360, %v358
          %v409 = vpack.c.bf16 %v361, %v359
          %v410 = vpack.c.bf16 %v364, %v362
          %v411 = vpack.c.bf16 %v365, %v363
          %v412 = vpack.c.bf16 %v368, %v366
          %v413 = vpack.c.bf16 %v369, %v367
          %v414 = vpack.c.bf16 %v372, %v370
          %v415 = vpack.c.bf16 %v373, %v371
          %v416 = vpack.c.bf16 %v376, %v374
          %v417 = vpack.c.bf16 %v377, %v375
          %v418 = vpack.c.bf16 %v380, %v378
          %v419 = vpack.c.bf16 %v381, %v379
          %v420 = vpack.c.bf16 %v384, %v382
          %v421 = vpack.c.bf16 %v385, %v383
          %v422 = vpack.c.bf16 %v388, %v386
          %v423 = vpack.c.bf16 %v389, %v387
          %v424 = vpack.c.bf16 %v392, %v390
          %v425 = vpack.c.bf16 %v393, %v391
          %v426 = vld [vmem:[#allocation8] sm:$0xf]
          %v427 = vld [vmem:[#allocation8 + $0x4] sm:$0xf]
          %v428 = vld [vmem:[#allocation8 + $0x8] sm:$0xf]
          %v429 = vld [vmem:[#allocation8 + $0xc] sm:$0xf]
          %v430 = vld [vmem:[#allocation8 + $0x10] sm:$0xf]
          %v431 = vld [vmem:[#allocation8 + $0x14] sm:$0xf]
          %v432 = vld [vmem:[#allocation8 + $0x18] sm:$0xf]
          %v433 = vld [vmem:[#allocation8 + $0x1c] sm:$0xf]
          %v434 = vld [vmem:[#allocation8 + $0x20] sm:$0xf]
          %v435 = vld [vmem:[#allocation8 + $0x24] sm:$0xf]
          %v436 = vld [vmem:[#allocation8 + $0x28] sm:$0xf]
          %v437 = vld [vmem:[#allocation8 + $0x2c] sm:$0xf]
          %v438 = vld [vmem:[#allocation8 + $0x30] sm:$0xf]
          %v439 = vld [vmem:[#allocation8 + $0x34] sm:$0xf]
          %v440 = vld [vmem:[#allocation8 + $0x38] sm:$0xf]
          %v441 = vld [vmem:[#allocation8 + $0x3c] sm:$0xf]
          %v442 = vld [vmem:[#allocation8 + $0x40] sm:$0xf]
          %v443 = vld [vmem:[#allocation8 + $0x44] sm:$0xf]
          %v444 = vld [vmem:[#allocation8 + $0x48] sm:$0xf]
          %v445 = vld [vmem:[#allocation8 + $0x4c] sm:$0xf]
          %v446 = vld [vmem:[#allocation8 + $0x50] sm:$0xf]
          %v447 = vld [vmem:[#allocation8 + $0x54] sm:$0xf]
          %v448 = vld [vmem:[#allocation8 + $0x58] sm:$0xf]
          %v449 = vld [vmem:[#allocation8 + $0x5c] sm:$0xf]
          %v450 = vld [vmem:[#allocation8 + $0x60] sm:$0xf]
          %v451 = vld [vmem:[#allocation8 + $0x64] sm:$0xf]
          %v452 = vld [vmem:[#allocation8 + $0x68] sm:$0xf]
          %v453 = vld [vmem:[#allocation8 + $0x6c] sm:$0xf]
          %v454 = vld [vmem:[#allocation8 + $0x70] sm:$0xf]
          %v455 = vld [vmem:[#allocation8 + $0x74] sm:$0xf]
          %v456 = vld [vmem:[#allocation8 + $0x78] sm:$0xf]
          %v457 = vld [vmem:[#allocation8 + $0x7c] sm:$0xf]
          %v490 = vunpack.c.l.b16 %v426
          %v491 = vunpack.c.l.b16 %v427
          %v492 = vunpack.c.l.b16 %v428
          %v493 = vunpack.c.l.b16 %v429
          %v494 = vunpack.c.l.b16 %v430
          %v495 = vunpack.c.l.b16 %v431
          %v496 = vunpack.c.l.b16 %v432
          %v497 = vunpack.c.l.b16 %v433
          %v498 = vunpack.c.l.b16 %v434
          %v499 = vunpack.c.l.b16 %v435
          %v500 = vunpack.c.l.b16 %v436
          %v501 = vunpack.c.l.b16 %v437
          %v502 = vunpack.c.l.b16 %v438
          %v503 = vunpack.c.l.b16 %v439
          %v504 = vunpack.c.l.b16 %v440
          %v505 = vunpack.c.l.b16 %v441
          %v506 = vunpack.c.l.b16 %v442
          %v507 = vunpack.c.l.b16 %v443
          %v508 = vunpack.c.l.b16 %v444
          %v509 = vunpack.c.l.b16 %v445
          %v510 = vunpack.c.l.b16 %v446
          %v511 = vunpack.c.l.b16 %v447
          %v512 = vunpack.c.l.b16 %v448
          %v513 = vunpack.c.l.b16 %v449
          %v514 = vunpack.c.l.b16 %v450
          %v515 = vunpack.c.l.b16 %v451
          %v516 = vunpack.c.l.b16 %v452
          %v517 = vunpack.c.l.b16 %v453
          %v518 = vunpack.c.l.b16 %v454
          %v519 = vunpack.c.l.b16 %v455
          %v520 = vunpack.c.l.b16 %v456
          %v521 = vunpack.c.l.b16 %v457
          %v522 = vpack.c.b16 %v491, %v490
          %v523 = vpack.c.b16 %v493, %v492
          %v524 = vpack.c.b16 %v495, %v494
          %v525 = vpack.c.b16 %v497, %v496
          %v526 = vpack.c.b16 %v499, %v498
          %v527 = vpack.c.b16 %v501, %v500
          %v528 = vpack.c.b16 %v503, %v502
          %v529 = vpack.c.b16 %v505, %v504
          %v530 = vpack.c.b16 %v507, %v506
          %v531 = vpack.c.b16 %v509, %v508
          %v532 = vpack.c.b16 %v511, %v510
          %v533 = vpack.c.b16 %v513, %v512
          %v534 = vpack.c.b16 %v515, %v514
          %v535 = vpack.c.b16 %v517, %v516
          %v536 = vpack.c.b16 %v519, %v518
          %v537 = vpack.c.b16 %v521, %v520
          %554 = vmatprep.subr.bf16.mxu0 0
          %555 = vmatpush1.bf16.msra.mxu0 %v522
          %556 = vmatprep.subr.bf16.mxu0 0
          %557 = vmatpush1.bf16.msra.mxu0 %v523
          %558 = vmatprep.subr.bf16.mxu0 0
          %559 = vmatpush1.bf16.msra.mxu0 %v524
          %560 = vmatprep.subr.bf16.mxu0 0
          %561 = vmatpush1.bf16.msra.mxu0 %v525
          %562 = vmatprep.subr.bf16.mxu0 0
          %563 = vmatpush1.bf16.msra.mxu0 %v526
          %564 = vmatprep.subr.bf16.mxu0 0
          %565 = vmatpush1.bf16.msra.mxu0 %v527
          %566 = vmatprep.subr.bf16.mxu0 0
          %567 = vmatpush1.bf16.msra.mxu0 %v528
          %568 = vmatprep.subr.bf16.mxu0 0
          %569 = vmatpush1.bf16.msra.mxu0 %v529
          %570 = vmatprep.subr.bf16.mxu0 0
          %571 = vmatpush1.bf16.msra.mxu0 %v530
          %572 = vmatprep.subr.bf16.mxu0 0
          %573 = vmatpush1.bf16.msra.mxu0 %v531
          %574 = vmatprep.subr.bf16.mxu0 0
          %575 = vmatpush1.bf16.msra.mxu0 %v532
          %576 = vmatprep.subr.bf16.mxu0 0
          %577 = vmatpush1.bf16.msra.mxu0 %v533
          %578 = vmatprep.subr.bf16.mxu0 0
          %579 = vmatpush1.bf16.msra.mxu0 %v534
          %580 = vmatprep.subr.bf16.mxu0 0
          %581 = vmatpush1.bf16.msra.mxu0 %v535
          %582 = vmatprep.subr.bf16.mxu0 0
          %583 = vmatpush1.bf16.msra.mxu0 %v536
          %584 = vmatprep.subr.bf16.mxu0 0
          %585 = vmatpush1.bf16.msra.mxu0 %v537
          %586 = vmatprep.mubr.bf16.mxu0 %v395
          %587 = vmatmul.mubr.bf16.gmra.mrb[0].mxu0 %v394
          %v588 = vpop.f32.mrb[0].mxu0
          %v589 = vadd.f32 0.0, %v588
          %v590 = vpop.f32.mrb[0].mxu0
          %v591 = vpop.f32.mrb[0].mxu0
          %v592 = vadd.f32 0.0, %v591
          %v593 = vpop.f32.mrb[0].mxu0
          %594 = vmatprep.mubr.bf16.mxu0 %v397
          %595 = vmatmul.mubr.bf16.gmra.mrb[0].mxu0 %v396
          %v596 = vpop.f32.mrb[0].mxu0
          %v597 = vadd.f32 0.0, %v596
          %v598 = vpop.f32.mrb[0].mxu0
          %v599 = vpop.f32.mrb[0].mxu0
          %v600 = vadd.f32 0.0, %v599
          %v601 = vpop.f32.mrb[0].mxu0
          %602 = vmatprep.mubr.bf16.mxu0 %v399
          %603 = vmatmul.mubr.bf16.gmra.mrb[0].mxu0 %v398
          %v604 = vpop.f32.mrb[0].mxu0
          %v605 = vadd.f32 0.0, %v604
          %v606 = vpop.f32.mrb[0].mxu0
          %v607 = vpop.f32.mrb[0].mxu0
          %v608 = vadd.f32 0.0, %v607
          %v609 = vpop.f32.mrb[0].mxu0
          %610 = vmatprep.mubr.bf16.mxu0 %v401
          %611 = vmatmul.mubr.bf16.gmra.mrb[0].mxu0 %v400
          %v612 = vpop.f32.mrb[0].mxu0
          %v613 = vadd.f32 0.0, %v612
          %v614 = vpop.f32.mrb[0].mxu0
          %v615 = vpop.f32.mrb[0].mxu0
          %v616 = vadd.f32 0.0, %v615
          %v617 = vpop.f32.mrb[0].mxu0
          %618 = vmatprep.mubr.bf16.mxu0 %v403
          %619 = vmatmul.mubr.bf16.gmra.mrb[0].mxu0 %v402
          %v620 = vpop.f32.mrb[0].mxu0
          %v621 = vadd.f32 0.0, %v620
          %v622 = vpop.f32.mrb[0].mxu0
          %v623 = vpop.f32.mrb[0].mxu0
          %v624 = vadd.f32 0.0, %v623
          %v625 = vpop.f32.mrb[0].mxu0
          %626 = vmatprep.mubr.bf16.mxu0 %v405
          %627 = vmatmul.mubr.bf16.gmra.mrb[0].mxu0 %v404
          %v628 = vpop.f32.mrb[0].mxu0
          %v629 = vadd.f32 0.0, %v628
          %v630 = vpop.f32.mrb[0].mxu0
          %v631 = vpop.f32.mrb[0].mxu0
          %v632 = vadd.f32 0.0, %v631
          %v633 = vpop.f32.mrb[0].mxu0
          %634 = vmatprep.mubr.bf16.mxu0 %v407
          %635 = vmatmul.mubr.bf16.gmra.mrb[0].mxu0 %v406
          %v636 = vpop.f32.mrb[0].mxu0
          %v637 = vadd.f32 0.0, %v636
          %v638 = vpop.f32.mrb[0].mxu0
          %v639 = vpop.f32.mrb[0].mxu0
          %v640 = vadd.f32 0.0, %v639
          %v641 = vpop.f32.mrb[0].mxu0
          %642 = vmatprep.mubr.bf16.mxu0 %v409
          %643 = vmatmul.mubr.bf16.gmra.mrb[0].mxu0 %v408
          %v644 = vpop.f32.mrb[0].mxu0
          %v645 = vadd.f32 0.0, %v644
          %v646 = vpop.f32.mrb[0].mxu0
          %v647 = vpop.f32.mrb[0].mxu0
          %v648 = vadd.f32 0.0, %v647
          %v649 = vpop.f32.mrb[0].mxu0
          %650 = vmatprep.mubr.bf16.mxu0 %v411
          %651 = vmatmul.mubr.bf16.gmra.mrb[0].mxu0 %v410
          %v652 = vpop.f32.mrb[0].mxu0
          %v653 = vadd.f32 0.0, %v652
          %v654 = vpop.f32.mrb[0].mxu0
          %v655 = vpop.f32.mrb[0].mxu0
          %v656 = vadd.f32 0.0, %v655
          %v657 = vpop.f32.mrb[0].mxu0
          %658 = vmatprep.mubr.bf16.mxu0 %v413
          %659 = vmatmul.mubr.bf16.gmra.mrb[0].mxu0 %v412
          %v660 = vpop.f32.mrb[0].mxu0
          %v661 = vadd.f32 0.0, %v660
          %v662 = vpop.f32.mrb[0].mxu0
          %v663 = vpop.f32.mrb[0].mxu0
          %v664 = vadd.f32 0.0, %v663
          %v665 = vpop.f32.mrb[0].mxu0
          %666 = vmatprep.mubr.bf16.mxu0 %v415
          %667 = vmatmul.mubr.bf16.gmra.mrb[0].mxu0 %v414
          %v668 = vpop.f32.mrb[0].mxu0
          %v669 = vadd.f32 0.0, %v668
          %v670 = vpop.f32.mrb[0].mxu0
          %v671 = vpop.f32.mrb[0].mxu0
          %v672 = vadd.f32 0.0, %v671
          %v673 = vpop.f32.mrb[0].mxu0
          %674 = vmatprep.mubr.bf16.mxu0 %v417
          %675 = vmatmul.mubr.bf16.gmra.mrb[0].mxu0 %v416
          %v676 = vpop.f32.mrb[0].mxu0
          %v677 = vadd.f32 0.0, %v676
          %v678 = vpop.f32.mrb[0].mxu0
          %v679 = vpop.f32.mrb[0].mxu0
          %v680 = vadd.f32 0.0, %v679
          %v681 = vpop.f32.mrb[0].mxu0
          %682 = vmatprep.mubr.bf16.mxu0 %v419
          %683 = vmatmul.mubr.bf16.gmra.mrb[0].mxu0 %v418
          %v684 = vpop.f32.mrb[0].mxu0
          %v685 = vadd.f32 0.0, %v684
          %v686 = vpop.f32.mrb[0].mxu0
          %v687 = vpop.f32.mrb[0].mxu0
          %v688 = vadd.f32 0.0, %v687
          %v689 = vpop.f32.mrb[0].mxu0
          %690 = vmatprep.mubr.bf16.mxu0 %v421
          %691 = vmatmul.mubr.bf16.gmra.mrb[0].mxu0 %v420
          %v692 = vpop.f32.mrb[0].mxu0
          %v693 = vadd.f32 0.0, %v692
          %v694 = vpop.f32.mrb[0].mxu0
          %v695 = vpop.f32.mrb[0].mxu0
          %v696 = vadd.f32 0.0, %v695
          %v697 = vpop.f32.mrb[0].mxu0
          %698 = vmatprep.mubr.bf16.mxu0 %v423
          %699 = vmatmul.mubr.bf16.gmra.mrb[0].mxu0 %v422
          %v700 = vpop.f32.mrb[0].mxu0
          %v701 = vadd.f32 0.0, %v700
          %v702 = vpop.f32.mrb[0].mxu0
          %v703 = vpop.f32.mrb[0].mxu0
          %v704 = vadd.f32 0.0, %v703
          %v705 = vpop.f32.mrb[0].mxu0
          %706 = vmatprep.mubr.bf16.mxu0 %v425
          %707 = vmatmul.mubr.bf16.gmra.mrb[0].mxu0 %v424
          %v708 = vpop.f32.mrb[0].mxu0
          %v709 = vadd.f32 0.0, %v708
          %v710 = vpop.f32.mrb[0].mxu0
          %v711 = vpop.f32.mrb[0].mxu0
          %v712 = vadd.f32 0.0, %v711
          %v713 = vpop.f32.mrb[0].mxu0
          %714 = vdwg.mxu0
          %p715 = scmp.eq.s32.totalorder %s29, 0
          // Predicated region
          $region61: #{tpu_custom_call.1} parent=59 // pred_check
            %p716 = pneg %p715
          $region62: #{tpu_custom_call.1} parent=59 // pred_check_branch
            %718 = sbr.rel (%p716) target = $region64
          $region63: #{tpu_custom_call.1} parent=59 // pred_region
            %719 = vst [vmem:[#allocation2] sm:$0x1] 0.0
            %720 = vst [vmem:[#allocation3] sm:$0x1] 0.0
          $region64: #{tpu_custom_call.1} parent=59 // pred_fallthru
            _
          %v721 = vld [vmem:[#allocation2] sm:$0x1]
          %v722 = vadd.f32 %v589, %v592
          %v723 = vadd.f32 %v722, %v597
          %v724 = vadd.f32 %v723, %v600
          %v725 = vadd.f32 %v724, %v605
          %v726 = vadd.f32 %v725, %v608
          %v727 = vadd.f32 %v726, %v613
          %v728 = vadd.f32 %v727, %v616
          %v729 = vadd.f32 %v728, %v621
          %v730 = vadd.f32 %v729, %v624
          %v731 = vadd.f32 %v730, %v629
          %v732 = vadd.f32 %v731, %v632
          %v733 = vadd.f32 %v732, %v637
          %v734 = vadd.f32 %v733, %v640
          %v735 = vadd.f32 %v734, %v645
          %v736 = vadd.f32 %v735, %v648
          %v737 = vadd.f32 %v736, %v653
          %v738 = vadd.f32 %v737, %v656
          %v739 = vadd.f32 %v738, %v661
          %v740 = vadd.f32 %v739, %v664
          %v741 = vadd.f32 %v740, %v669
          %v742 = vadd.f32 %v741, %v672
          %v743 = vadd.f32 %v742, %v677
          %v744 = vadd.f32 %v743, %v680
          %v745 = vadd.f32 %v744, %v685
          %v746 = vadd.f32 %v745, %v688
          %v747 = vadd.f32 %v746, %v693
          %v748 = vadd.f32 %v747, %v696
          %v749 = vadd.f32 %v748, %v701
          %v750 = vadd.f32 %v749, %v704
          %v751 = vadd.f32 %v750, %v709
          %v752 = vadd.f32 %v751, %v712
          %v753 = vrot.slane %v752, 4
          %v754 = vadd.f32 %v752, %v753
          %v755 = vrot.slane %v754, 2
          %v756 = vadd.f32 %v754, %v755
          %v757 = vrot.slane %v756, 1
          %v758 = vadd.f32 %v756, %v757
          %v759 = vadd.f32 %v721, %v758
          %760 = vst [vmem:[#allocation2] sm:$0x1] %v759
          %v761 = vld [vmem:[#allocation3] sm:$0x1]
          %v762 = vmul.f32 %v589, %v589
          %v763 = vmul.f32 %v592, %v592
          %v764 = vmul.f32 %v597, %v597
          %v765 = vmul.f32 %v600, %v600
          %v766 = vmul.f32 %v605, %v605
          %v767 = vmul.f32 %v608, %v608
          %v768 = vmul.f32 %v613, %v613
          %v769 = vmul.f32 %v616, %v616
          %v770 = vmul.f32 %v621, %v621
          %v771 = vmul.f32 %v624, %v624
          %v772 = vmul.f32 %v629, %v629
          %v773 = vmul.f32 %v632, %v632
          %v774 = vmul.f32 %v637, %v637
          %v775 = vmul.f32 %v640, %v640
          %v776 = vmul.f32 %v645, %v645
          %v777 = vmul.f32 %v648, %v648
          %v778 = vmul.f32 %v653, %v653
          %v779 = vmul.f32 %v656, %v656
          %v780 = vmul.f32 %v661, %v661
          %v781 = vmul.f32 %v664, %v664
          %v782 = vmul.f32 %v669, %v669
          %v783 = vmul.f32 %v672, %v672
          %v784 = vmul.f32 %v677, %v677
          %v785 = vmul.f32 %v680, %v680
          %v786 = vmul.f32 %v685, %v685
          %v787 = vmul.f32 %v688, %v688
          %v788 = vmul.f32 %v693, %v693
          %v789 = vmul.f32 %v696, %v696
          %v790 = vmul.f32 %v701, %v701
          %v791 = vmul.f32 %v704, %v704
          %v792 = vmul.f32 %v709, %v709
          %v793 = vmul.f32 %v712, %v712
          %v794 = vadd.f32 %v762, %v763
          %v795 = vadd.f32 %v794, %v764
          %v796 = vadd.f32 %v795, %v765
          %v797 = vadd.f32 %v796, %v766
          %v798 = vadd.f32 %v797, %v767
          %v799 = vadd.f32 %v798, %v768
          %v800 = vadd.f32 %v799, %v769
          %v801 = vadd.f32 %v800, %v770
          %v802 = vadd.f32 %v801, %v771
          %v803 = vadd.f32 %v802, %v772
          %v804 = vadd.f32 %v803, %v773
          %v805 = vadd.f32 %v804, %v774
          %v806 = vadd.f32 %v805, %v775
          %v807 = vadd.f32 %v806, %v776
          %v808 = vadd.f32 %v807, %v777
          %v809 = vadd.f32 %v808, %v778
          %v810 = vadd.f32 %v809, %v779
          %v811 = vadd.f32 %v810, %v780
          %v812 = vadd.f32 %v811, %v781
          %v813 = vadd.f32 %v812, %v782
          %v814 = vadd.f32 %v813, %v783
          %v815 = vadd.f32 %v814, %v784
          %v816 = vadd.f32 %v815, %v785
          %v817 = vadd.f32 %v816, %v786
          %v818 = vadd.f32 %v817, %v787
          %v819 = vadd.f32 %v818, %v788
          %v820 = vadd.f32 %v819, %v789
          %v821 = vadd.f32 %v820, %v790
          %v822 = vadd.f32 %v821, %v791
          %v823 = vadd.f32 %v822, %v792
          %v824 = vadd.f32 %v823, %v793
          %v825 = vrot.slane %v824, 4
          %v826 = vadd.f32 %v824, %v825
          %v827 = vrot.slane %v826, 2
          %v828 = vadd.f32 %v826, %v827
          %v829 = vrot.slane %v828, 1
          %v830 = vadd.f32 %v828, %v829
          %v831 = vadd.f32 %v761, %v830
          %832 = vst [vmem:[#allocation3] sm:$0x1] %v831
          %v833 = vpack.c.bf16 %v592, %v589
          %v834 = vpack.c.bf16 %v600, %v597
          %v835 = vpack.c.bf16 %v608, %v605
          %v836 = vpack.c.bf16 %v616, %v613
          %v837 = vpack.c.bf16 %v624, %v621
          %v838 = vpack.c.bf16 %v632, %v629
          %v839 = vpack.c.bf16 %v640, %v637
          %v840 = vpack.c.bf16 %v648, %v645
          %v841 = vpack.c.bf16 %v656, %v653
          %v842 = vpack.c.bf16 %v664, %v661
          %v843 = vpack.c.bf16 %v672, %v669
          %v844 = vpack.c.bf16 %v680, %v677
          %v845 = vpack.c.bf16 %v688, %v685
          %v846 = vpack.c.bf16 %v696, %v693
          %v847 = vpack.c.bf16 %v704, %v701
          %v848 = vpack.c.bf16 %v712, %v709
          %s849 = smul.u32 %s29, 16
          %s850 = smul.addr %s849, 8
          %s851 = scalar_lea.vmem [#allocation4], %s850
          %852 = vst [vmem:[%s851] sm:$0xff] %v833
          %853 = vst [vmem:[%s851 + $0x8] sm:$0xff] %v834
          %854 = vst [vmem:[%s851 + $0x10] sm:$0xff] %v835
          %855 = vst [vmem:[%s851 + $0x18] sm:$0xff] %v836
          %856 = vst [vmem:[%s851 + $0x20] sm:$0xff] %v837
          %857 = vst [vmem:[%s851 + $0x28] sm:$0xff] %v838
          %858 = vst [vmem:[%s851 + $0x30] sm:$0xff] %v839
          %859 = vst [vmem:[%s851 + $0x38] sm:$0xff] %v840
          %860 = vst [vmem:[%s851 + $0x40] sm:$0xff] %v841
          %861 = vst [vmem:[%s851 + $0x48] sm:$0xff] %v842
          %862 = vst [vmem:[%s851 + $0x50] sm:$0xff] %v843
          %863 = vst [vmem:[%s851 + $0x58] sm:$0xff] %v844
          %864 = vst [vmem:[%s851 + $0x60] sm:$0xff] %v845
          %865 = vst [vmem:[%s851 + $0x68] sm:$0xff] %v846
          %866 = vst [vmem:[%s851 + $0x70] sm:$0xff] %v847
          %867 = vst [vmem:[%s851 + $0x78] sm:$0xff] %v848
        $region60: #{tpu_custom_call.1} parent=43 // pred_fallthru
          _
        %p868 = scmp.eq.s32.totalorder %s28, 1
        // Predicated region
        $region65: #{tpu_custom_call.1} parent=43 // pred_check
          %p869 = pneg %p868
        $region66: #{tpu_custom_call.1} parent=43 // pred_check_branch
          %871 = sbr.rel (%p869) target = $region68
        $region67: #{tpu_custom_call.1} parent=43 // pred_region
          %p872 = scmp.eq.s32.totalorder %s29, 0
          // Predicated region
          $region69: #{tpu_custom_call.1} parent=67 // pred_check
            %p873 = pneg %p872
          $region70: #{tpu_custom_call.1} parent=67 // pred_check_branch
            %875 = sbr.rel (%p873) target = $region72
          $region71: #{tpu_custom_call.1} parent=67 // pred_region
            %v876 = vld [vmem:[#allocation2] sm:$0x1]
            %v877 = vmul.f32 %v876, 0.00390625
            %v878 = vld [vmem:[#allocation3] sm:$0x1]
            %v879 = vmul.f32 %v878, 0.00390625
            %v880 = vmul.f32 %v877, %v877
            %v881 = vsub.f32 %v879, %v880
            %v882 = vmax.f32 %v881, 0.0
            %v883 = vadd.f32 %v882, 1e-05
            %v884 = vrsqrt.pop %v883
            %v885 = vld [vmem:[%s2] sm:$0x1]
            %v886 = vmul.f32 %v885, %v884
            %887 = vst [vmem:[#allocation2] sm:$0x1] %v886
            %v888 = vld [vmem:[%s3] sm:$0x1]
            %v889 = vmul.f32 %v877, %v886
            %v890 = vsub.f32 %v888, %v889
            %891 = vst [vmem:[#allocation3] sm:$0x1] %v890
          $region72: #{tpu_custom_call.1} parent=67 // pred_fallthru
            _
          %s892 = smul.u32 %s29, 16
          %s893 = smul.addr %s892, 8
          %s894 = scalar_lea.vmem [#allocation4], %s893
          %v895 = vld [vmem:[%s894] sm:$0xff]
          %v896 = vld [vmem:[%s894 + $0x8] sm:$0xff]
          %v897 = vld [vmem:[%s894 + $0x10] sm:$0xff]
          %v898 = vld [vmem:[%s894 + $0x18] sm:$0xff]
          %v899 = vld [vmem:[%s894 + $0x20] sm:$0xff]
          %v900 = vld [vmem:[%s894 + $0x28] sm:$0xff]
          %v901 = vld [vmem:[%s894 + $0x30] sm:$0xff]
          %v902 = vld [vmem:[%s894 + $0x38] sm:$0xff]
          %v903 = vld [vmem:[%s894 + $0x40] sm:$0xff]
          %v904 = vld [vmem:[%s894 + $0x48] sm:$0xff]
          %v905 = vld [vmem:[%s894 + $0x50] sm:$0xff]
          %v906 = vld [vmem:[%s894 + $0x58] sm:$0xff]
          %v907 = vld [vmem:[%s894 + $0x60] sm:$0xff]
          %v908 = vld [vmem:[%s894 + $0x68] sm:$0xff]
          %v909 = vld [vmem:[%s894 + $0x70] sm:$0xff]
          %v910 = vld [vmem:[%s894 + $0x78] sm:$0xff]
          %v911 = vunpack.c.l.bf16 %v895
          %v912 = vunpack.c.h.bf16 %v895
          %v913 = vunpack.c.l.bf16 %v896
          %v914 = vunpack.c.h.bf16 %v896
          %v915 = vunpack.c.l.bf16 %v897
          %v916 = vunpack.c.h.bf16 %v897
          %v917 = vunpack.c.l.bf16 %v898
          %v918 = vunpack.c.h.bf16 %v898
          %v919 = vunpack.c.l.bf16 %v899
          %v920 = vunpack.c.h.bf16 %v899
          %v921 = vunpack.c.l.bf16 %v900
          %v922 = vunpack.c.h.bf16 %v900
          %v923 = vunpack.c.l.bf16 %v901
          %v924 = vunpack.c.h.bf16 %v901
          %v925 = vunpack.c.l.bf16 %v902
          %v926 = vunpack.c.h.bf16 %v902
          %v927 = vunpack.c.l.bf16 %v903
          %v928 = vunpack.c.h.bf16 %v903
          %v929 = vunpack.c.l.bf16 %v904
          %v930 = vunpack.c.h.bf16 %v904
          %v931 = vunpack.c.l.bf16 %v905
          %v932 = vunpack.c.h.bf16 %v905
          %v933 = vunpack.c.l.bf16 %v906
          %v934 = vunpack.c.h.bf16 %v906
          %v935 = vunpack.c.l.bf16 %v907
          %v936 = vunpack.c.h.bf16 %v907
          %v937 = vunpack.c.l.bf16 %v908
          %v938 = vunpack.c.h.bf16 %v908
          %v939 = vunpack.c.l.bf16 %v909
          %v940 = vunpack.c.h.bf16 %v909
          %v941 = vunpack.c.l.bf16 %v910
          %v942 = vunpack.c.h.bf16 %v910
          %v943 = vld [vmem:[#allocation2] sm:$0x1]
          %v945 = vlaneseq
          %v946 = vshrl.u32 %v945, 7
          %v947 = vsub.s32 0, %v946
          %v948 = vrot.slane %v943, %v947
          %v950 = vmul.f32 %v911, %v948
          %v951 = vmul.f32 %v912, %v948
          %v952 = vmul.f32 %v913, %v948
          %v953 = vmul.f32 %v914, %v948
          %v954 = vmul.f32 %v915, %v948
          %v955 = vmul.f32 %v916, %v948
          %v956 = vmul.f32 %v917, %v948
          %v957 = vmul.f32 %v918, %v948
          %v958 = vmul.f32 %v919, %v948
          %v959 = vmul.f32 %v920, %v948
          %v960 = vmul.f32 %v921, %v948
          %v961 = vmul.f32 %v922, %v948
          %v962 = vmul.f32 %v923, %v948
          %v963 = vmul.f32 %v924, %v948
          %v964 = vmul.f32 %v925, %v948
          %v965 = vmul.f32 %v926, %v948
          %v966 = vmul.f32 %v927, %v948
          %v967 = vmul.f32 %v928, %v948
          %v968 = vmul.f32 %v929, %v948
          %v969 = vmul.f32 %v930, %v948
          %v970 = vmul.f32 %v931, %v948
          %v971 = vmul.f32 %v932, %v948
          %v972 = vmul.f32 %v933, %v948
          %v973 = vmul.f32 %v934, %v948
          %v974 = vmul.f32 %v935, %v948
          %v975 = vmul.f32 %v936, %v948
          %v976 = vmul.f32 %v937, %v948
          %v977 = vmul.f32 %v938, %v948
          %v978 = vmul.f32 %v939, %v948
          %v979 = vmul.f32 %v940, %v948
          %v980 = vmul.f32 %v941, %v948
          %v981 = vmul.f32 %v942, %v948
          %v982 = vld [vmem:[#allocation3] sm:$0x1]
          %v984 = vlaneseq
          %v985 = vshrl.u32 %v984, 7
          %v986 = vsub.s32 0, %v985
          %v987 = vrot.slane %v982, %v986
          %v989 = vadd.f32 %v950, %v987
          %v990 = vadd.f32 %v951, %v987
          %v991 = vadd.f32 %v952, %v987
          %v992 = vadd.f32 %v953, %v987
          %v993 = vadd.f32 %v954, %v987
          %v994 = vadd.f32 %v955, %v987
          %v995 = vadd.f32 %v956, %v987
          %v996 = vadd.f32 %v957, %v987
          %v997 = vadd.f32 %v958, %v987
          %v998 = vadd.f32 %v959, %v987
          %v999 = vadd.f32 %v960, %v987
          %v1000 = vadd.f32 %v961, %v987
          %v1001 = vadd.f32 %v962, %v987
          %v1002 = vadd.f32 %v963, %v987
          %v1003 = vadd.f32 %v964, %v987
          %v1004 = vadd.f32 %v965, %v987
          %v1005 = vadd.f32 %v966, %v987
          %v1006 = vadd.f32 %v967, %v987
          %v1007 = vadd.f32 %v968, %v987
          %v1008 = vadd.f32 %v969, %v987
          %v1009 = vadd.f32 %v970, %v987
          %v1010 = vadd.f32 %v971, %v987
          %v1011 = vadd.f32 %v972, %v987
          %v1012 = vadd.f32 %v973, %v987
          %v1013 = vadd.f32 %v974, %v987
          %v1014 = vadd.f32 %v975, %v987
          %v1015 = vadd.f32 %v976, %v987
          %v1016 = vadd.f32 %v977, %v987
          %v1017 = vadd.f32 %v978, %v987
          %v1018 = vadd.f32 %v979, %v987
          %v1019 = vadd.f32 %v980, %v987
          %v1020 = vadd.f32 %v981, %v987
          %v1021 = vmax.f32 %v989, 0.0
          %v1022 = vmax.f32 %v990, 0.0
          %v1023 = vmax.f32 %v991, 0.0
          %v1024 = vmax.f32 %v992, 0.0
          %v1025 = vmax.f32 %v993, 0.0
          %v1026 = vmax.f32 %v994, 0.0
          %v1027 = vmax.f32 %v995, 0.0
          %v1028 = vmax.f32 %v996, 0.0
          %v1029 = vmax.f32 %v997, 0.0
          %v1030 = vmax.f32 %v998, 0.0
          %v1031 = vmax.f32 %v999, 0.0
          %v1032 = vmax.f32 %v1000, 0.0
          %v1033 = vmax.f32 %v1001, 0.0
          %v1034 = vmax.f32 %v1002, 0.0
          %v1035 = vmax.f32 %v1003, 0.0
          %v1036 = vmax.f32 %v1004, 0.0
          %v1037 = vmax.f32 %v1005, 0.0
          %v1038 = vmax.f32 %v1006, 0.0
          %v1039 = vmax.f32 %v1007, 0.0
          %v1040 = vmax.f32 %v1008, 0.0
          %v1041 = vmax.f32 %v1009, 0.0
          %v1042 = vmax.f32 %v1010, 0.0
          %v1043 = vmax.f32 %v1011, 0.0
          %v1044 = vmax.f32 %v1012, 0.0
          %v1045 = vmax.f32 %v1013, 0.0
          %v1046 = vmax.f32 %v1014, 0.0
          %v1047 = vmax.f32 %v1015, 0.0
          %v1048 = vmax.f32 %v1016, 0.0
          %v1049 = vmax.f32 %v1017, 0.0
          %v1050 = vmax.f32 %v1018, 0.0
          %v1051 = vmax.f32 %v1019, 0.0
          %v1052 = vmax.f32 %v1020, 0.0
          %v1053 = vpack.c.bf16 %v1022, %v1021
          %v1054 = vpack.c.bf16 %v1024, %v1023
          %v1055 = vpack.c.bf16 %v1026, %v1025
          %v1056 = vpack.c.bf16 %v1028, %v1027
          %v1057 = vpack.c.bf16 %v1030, %v1029
          %v1058 = vpack.c.bf16 %v1032, %v1031
          %v1059 = vpack.c.bf16 %v1034, %v1033
          %v1060 = vpack.c.bf16 %v1036, %v1035
          %v1061 = vpack.c.bf16 %v1038, %v1037
          %v1062 = vpack.c.bf16 %v1040, %v1039
          %v1063 = vpack.c.bf16 %v1042, %v1041
          %v1064 = vpack.c.bf16 %v1044, %v1043
          %v1065 = vpack.c.bf16 %v1046, %v1045
          %v1066 = vpack.c.bf16 %v1048, %v1047
          %v1067 = vpack.c.bf16 %v1050, %v1049
          %v1068 = vpack.c.bf16 %v1052, %v1051
          %v1069 = vld [vmem:[#allocation10] sm:$0xff]
          %v1070 = vld [vmem:[#allocation10 + $0x8] sm:$0xff]
          %v1071 = vld [vmem:[#allocation10 + $0x10] sm:$0xff]
          %v1072 = vld [vmem:[#allocation10 + $0x18] sm:$0xff]
          %v1073 = vld [vmem:[#allocation10 + $0x20] sm:$0xff]
          %v1074 = vld [vmem:[#allocation10 + $0x28] sm:$0xff]
          %v1075 = vld [vmem:[#allocation10 + $0x30] sm:$0xff]
          %v1076 = vld [vmem:[#allocation10 + $0x38] sm:$0xff]
          %v1077 = vld [vmem:[#allocation10 + $0x40] sm:$0xff]
          %v1078 = vld [vmem:[#allocation10 + $0x48] sm:$0xff]
          %v1079 = vld [vmem:[#allocation10 + $0x50] sm:$0xff]
          %v1080 = vld [vmem:[#allocation10 + $0x58] sm:$0xff]
          %v1081 = vld [vmem:[#allocation10 + $0x60] sm:$0xff]
          %v1082 = vld [vmem:[#allocation10 + $0x68] sm:$0xff]
          %v1083 = vld [vmem:[#allocation10 + $0x70] sm:$0xff]
          %v1084 = vld [vmem:[#allocation10 + $0x78] sm:$0xff]
          %v1085 = vld [vmem:[%s5] sm:$0x3]
          %v1087 = vlaneseq
          %v1088 = vshrl.u32 %v1087, 7
          %v1089 = vsub.s32 0, %v1088
          %v1090 = vrot.slane %v1085, %v1089
          %v1091 = vlaneseq
          %v1092 = vshrl.u32 %v1091, 7
          %v1093 = vsub.s32 1, %v1092
          %v1094 = vrot.slane %v1085, %v1093
          %v1113 = vunpack.c.l.b16 %v1069
          %v1114 = vunpack.c.h.b16 %v1069
          %v1115 = vunpack.c.l.b16 %v1070
          %v1116 = vunpack.c.h.b16 %v1070
          %v1117 = vunpack.c.l.b16 %v1071
          %v1118 = vunpack.c.h.b16 %v1071
          %v1119 = vunpack.c.l.b16 %v1072
          %v1120 = vunpack.c.h.b16 %v1072
          %v1121 = vunpack.c.l.b16 %v1073
          %v1122 = vunpack.c.h.b16 %v1073
          %v1123 = vunpack.c.l.b16 %v1074
          %v1124 = vunpack.c.h.b16 %v1074
          %v1125 = vunpack.c.l.b16 %v1075
          %v1126 = vunpack.c.h.b16 %v1075
          %v1127 = vunpack.c.l.b16 %v1076
          %v1128 = vunpack.c.h.b16 %v1076
          %v1129 = vunpack.c.l.b16 %v1077
          %v1130 = vunpack.c.h.b16 %v1077
          %v1131 = vunpack.c.l.b16 %v1078
          %v1132 = vunpack.c.h.b16 %v1078
          %v1133 = vunpack.c.l.b16 %v1079
          %v1134 = vunpack.c.h.b16 %v1079
          %v1135 = vunpack.c.l.b16 %v1080
          %v1136 = vunpack.c.h.b16 %v1080
          %v1137 = vunpack.c.l.b16 %v1081
          %v1138 = vunpack.c.h.b16 %v1081
          %v1139 = vunpack.c.l.b16 %v1082
          %v1140 = vunpack.c.h.b16 %v1082
          %v1141 = vunpack.c.l.b16 %v1083
          %v1142 = vunpack.c.h.b16 %v1083
          %v1143 = vunpack.c.l.b16 %v1084
          %v1144 = vunpack.c.h.b16 %v1084
          %v1145 = vpack.c.b16 %v1115, %v1113
          %v1146 = vpack.c.b16 %v1116, %v1114
          %v1147 = vpack.c.b16 %v1119, %v1117
          %v1148 = vpack.c.b16 %v1120, %v1118
          %v1149 = vpack.c.b16 %v1123, %v1121
          %v1150 = vpack.c.b16 %v1124, %v1122
          %v1151 = vpack.c.b16 %v1127, %v1125
          %v1152 = vpack.c.b16 %v1128, %v1126
          %v1153 = vpack.c.b16 %v1131, %v1129
          %v1154 = vpack.c.b16 %v1132, %v1130
          %v1155 = vpack.c.b16 %v1135, %v1133
          %v1156 = vpack.c.b16 %v1136, %v1134
          %v1157 = vpack.c.b16 %v1139, %v1137
          %v1158 = vpack.c.b16 %v1140, %v1138
          %v1159 = vpack.c.b16 %v1143, %v1141
          %v1160 = vpack.c.b16 %v1144, %v1142
          %1177 = vmatprep.subr.bf16.mxu0 %v1146
          %1178 = vmatpush1.bf16.msra.mxu0 %v1145
          %1179 = vmatprep.subr.bf16.mxu0 %v1148
          %1180 = vmatpush1.bf16.msra.mxu0 %v1147
          %1181 = vmatprep.subr.bf16.mxu0 %v1150
          %1182 = vmatpush1.bf16.msra.mxu0 %v1149
          %1183 = vmatprep.subr.bf16.mxu0 %v1152
          %1184 = vmatpush1.bf16.msra.mxu0 %v1151
          %1185 = vmatprep.subr.bf16.mxu0 %v1154
          %1186 = vmatpush1.bf16.msra.mxu0 %v1153
          %1187 = vmatprep.subr.bf16.mxu0 %v1156
          %1188 = vmatpush1.bf16.msra.mxu0 %v1155
          %1189 = vmatprep.subr.bf16.mxu0 %v1158
          %1190 = vmatpush1.bf16.msra.mxu0 %v1157
          %1191 = vmatprep.subr.bf16.mxu0 %v1160
          %1192 = vmatpush1.bf16.msra.mxu0 %v1159
          %1193 = vmatprep.subr.bf16.mxu0 0
          %1194 = vmatpush1.bf16.msra.mxu0 0
          %1195 = vmatprep.subr.bf16.mxu0 0
          %1196 = vmatpush1.bf16.msra.mxu0 0
          %1197 = vmatprep.subr.bf16.mxu0 0
          %1198 = vmatpush1.bf16.msra.mxu0 0
          %1199 = vmatprep.subr.bf16.mxu0 0
          %1200 = vmatpush1.bf16.msra.mxu0 0
          %1201 = vmatprep.subr.bf16.mxu0 0
          %1202 = vmatpush1.bf16.msra.mxu0 0
          %1203 = vmatprep.subr.bf16.mxu0 0
          %1204 = vmatpush1.bf16.msra.mxu0 0
          %1205 = vmatprep.subr.bf16.mxu0 0
          %1206 = vmatpush1.bf16.msra.mxu0 0
          %1207 = vmatprep.subr.bf16.mxu0 0
          %1208 = vmatpush1.bf16.msra.mxu0 0
          %1209 = vmatprep.mubr.bf16.mxu0 0
          %1210 = vmatmul.mubr.bf16.gmra.mrb[0].mxu0 %v1053
          %v1211 = vpop.f32.mrb[0].mxu0
          %v1212 = vadd.f32 %v1090, %v1211
          %v1213 = vpop.f32.mrb[0].mxu0
          %v1214 = vadd.f32 %v1094, %v1213
          %v1215 = vpop.f32.mrb[0].mxu0
          %v1216 = vadd.f32 %v1090, %v1215
          %v1217 = vpop.f32.mrb[0].mxu0
          %v1218 = vadd.f32 %v1094, %v1217
          %1219 = vmatprep.mubr.bf16.mxu0 0
          %1220 = vmatmul.mubr.bf16.gmra.mrb[0].mxu0 %v1054
          %v1221 = vpop.f32.mrb[0].mxu0
          %v1222 = vadd.f32 %v1090, %v1221
          %v1223 = vpop.f32.mrb[0].mxu0
          %v1224 = vadd.f32 %v1094, %v1223
          %v1225 = vpop.f32.mrb[0].mxu0
          %v1226 = vadd.f32 %v1090, %v1225
          %v1227 = vpop.f32.mrb[0].mxu0
          %v1228 = vadd.f32 %v1094, %v1227
          %1229 = vmatprep.mubr.bf16.mxu0 0
          %1230 = vmatmul.mubr.bf16.gmra.mrb[0].mxu0 %v1055
          %v1231 = vpop.f32.mrb[0].mxu0
          %v1232 = vadd.f32 %v1090, %v1231
          %v1233 = vpop.f32.mrb[0].mxu0
          %v1234 = vadd.f32 %v1094, %v1233
          %v1235 = vpop.f32.mrb[0].mxu0
          %v1236 = vadd.f32 %v1090, %v1235
          %v1237 = vpop.f32.mrb[0].mxu0
          %v1238 = vadd.f32 %v1094, %v1237
          %1239 = vmatprep.mubr.bf16.mxu0 0
          %1240 = vmatmul.mubr.bf16.gmra.mrb[0].mxu0 %v1056
          %v1241 = vpop.f32.mrb[0].mxu0
          %v1242 = vadd.f32 %v1090, %v1241
          %v1243 = vpop.f32.mrb[0].mxu0
          %v1244 = vadd.f32 %v1094, %v1243
          %v1245 = vpop.f32.mrb[0].mxu0
          %v1246 = vadd.f32 %v1090, %v1245
          %v1247 = vpop.f32.mrb[0].mxu0
          %v1248 = vadd.f32 %v1094, %v1247
          %1249 = vmatprep.mubr.bf16.mxu0 0
          %1250 = vmatmul.mubr.bf16.gmra.mrb[0].mxu0 %v1057
          %v1251 = vpop.f32.mrb[0].mxu0
          %v1252 = vadd.f32 %v1090, %v1251
          %v1253 = vpop.f32.mrb[0].mxu0
          %v1254 = vadd.f32 %v1094, %v1253
          %v1255 = vpop.f32.mrb[0].mxu0
          %v1256 = vadd.f32 %v1090, %v1255
          %v1257 = vpop.f32.mrb[0].mxu0
          %v1258 = vadd.f32 %v1094, %v1257
          %1259 = vmatprep.mubr.bf16.mxu0 0
          %1260 = vmatmul.mubr.bf16.gmra.mrb[0].mxu0 %v1058
          %v1261 = vpop.f32.mrb[0].mxu0
          %v1262 = vadd.f32 %v1090, %v1261
          %v1263 = vpop.f32.mrb[0].mxu0
          %v1264 = vadd.f32 %v1094, %v1263
          %v1265 = vpop.f32.mrb[0].mxu0
          %v1266 = vadd.f32 %v1090, %v1265
          %v1267 = vpop.f32.mrb[0].mxu0
          %v1268 = vadd.f32 %v1094, %v1267
          %1269 = vmatprep.mubr.bf16.mxu0 0
          %1270 = vmatmul.mubr.bf16.gmra.mrb[0].mxu0 %v1059
          %v1271 = vpop.f32.mrb[0].mxu0
          %v1272 = vadd.f32 %v1090, %v1271
          %v1273 = vpop.f32.mrb[0].mxu0
          %v1274 = vadd.f32 %v1094, %v1273
          %v1275 = vpop.f32.mrb[0].mxu0
          %v1276 = vadd.f32 %v1090, %v1275
          %v1277 = vpop.f32.mrb[0].mxu0
          %v1278 = vadd.f32 %v1094, %v1277
          %1279 = vmatprep.mubr.bf16.mxu0 0
          %1280 = vmatmul.mubr.bf16.gmra.mrb[0].mxu0 %v1060
          %v1281 = vpop.f32.mrb[0].mxu0
          %v1282 = vadd.f32 %v1090, %v1281
          %v1283 = vpop.f32.mrb[0].mxu0
          %v1284 = vadd.f32 %v1094, %v1283
          %v1285 = vpop.f32.mrb[0].mxu0
          %v1286 = vadd.f32 %v1090, %v1285
          %v1287 = vpop.f32.mrb[0].mxu0
          %v1288 = vadd.f32 %v1094, %v1287
          %1289 = vmatprep.mubr.bf16.mxu0 0
          %1290 = vmatmul.mubr.bf16.gmra.mrb[0].mxu0 %v1061
          %v1291 = vpop.f32.mrb[0].mxu0
          %v1292 = vadd.f32 %v1090, %v1291
          %v1293 = vpop.f32.mrb[0].mxu0
          %v1294 = vadd.f32 %v1094, %v1293
          %v1295 = vpop.f32.mrb[0].mxu0
          %v1296 = vadd.f32 %v1090, %v1295
          %v1297 = vpop.f32.mrb[0].mxu0
          %v1298 = vadd.f32 %v1094, %v1297
          %1299 = vmatprep.mubr.bf16.mxu0 0
          %1300 = vmatmul.mubr.bf16.gmra.mrb[0].mxu0 %v1062
          %v1301 = vpop.f32.mrb[0].mxu0
          %v1302 = vadd.f32 %v1090, %v1301
          %v1303 = vpop.f32.mrb[0].mxu0
          %v1304 = vadd.f32 %v1094, %v1303
          %v1305 = vpop.f32.mrb[0].mxu0
          %v1306 = vadd.f32 %v1090, %v1305
          %v1307 = vpop.f32.mrb[0].mxu0
          %v1308 = vadd.f32 %v1094, %v1307
          %1309 = vmatprep.mubr.bf16.mxu0 0
          %1310 = vmatmul.mubr.bf16.gmra.mrb[0].mxu0 %v1063
          %v1311 = vpop.f32.mrb[0].mxu0
          %v1312 = vadd.f32 %v1090, %v1311
          %v1313 = vpop.f32.mrb[0].mxu0
          %v1314 = vadd.f32 %v1094, %v1313
          %v1315 = vpop.f32.mrb[0].mxu0
          %v1316 = vadd.f32 %v1090, %v1315
          %v1317 = vpop.f32.mrb[0].mxu0
          %v1318 = vadd.f32 %v1094, %v1317
          %1319 = vmatprep.mubr.bf16.mxu0 0
          %1320 = vmatmul.mubr.bf16.gmra.mrb[0].mxu0 %v1064
          %v1321 = vpop.f32.mrb[0].mxu0
          %v1322 = vadd.f32 %v1090, %v1321
          %v1323 = vpop.f32.mrb[0].mxu0
          %v1324 = vadd.f32 %v1094, %v1323
          %v1325 = vpop.f32.mrb[0].mxu0
          %v1326 = vadd.f32 %v1090, %v1325
          %v1327 = vpop.f32.mrb[0].mxu0
          %v1328 = vadd.f32 %v1094, %v1327
          %1329 = vmatprep.mubr.bf16.mxu0 0
          %1330 = vmatmul.mubr.bf16.gmra.mrb[0].mxu0 %v1065
          %v1331 = vpop.f32.mrb[0].mxu0
          %v1332 = vadd.f32 %v1090, %v1331
          %v1333 = vpop.f32.mrb[0].mxu0
          %v1334 = vadd.f32 %v1094, %v1333
          %v1335 = vpop.f32.mrb[0].mxu0
          %v1336 = vadd.f32 %v1090, %v1335
          %v1337 = vpop.f32.mrb[0].mxu0
          %v1338 = vadd.f32 %v1094, %v1337
          %1339 = vmatprep.mubr.bf16.mxu0 0
          %1340 = vmatmul.mubr.bf16.gmra.mrb[0].mxu0 %v1066
          %v1341 = vpop.f32.mrb[0].mxu0
          %v1342 = vadd.f32 %v1090, %v1341
          %v1343 = vpop.f32.mrb[0].mxu0
          %v1344 = vadd.f32 %v1094, %v1343
          %v1345 = vpop.f32.mrb[0].mxu0
          %v1346 = vadd.f32 %v1090, %v1345
          %v1347 = vpop.f32.mrb[0].mxu0
          %v1348 = vadd.f32 %v1094, %v1347
          %1349 = vmatprep.mubr.bf16.mxu0 0
          %1350 = vmatmul.mubr.bf16.gmra.mrb[0].mxu0 %v1067
          %v1351 = vpop.f32.mrb[0].mxu0
          %v1352 = vadd.f32 %v1090, %v1351
          %v1353 = vpop.f32.mrb[0].mxu0
          %v1354 = vadd.f32 %v1094, %v1353
          %v1355 = vpop.f32.mrb[0].mxu0
          %v1356 = vadd.f32 %v1090, %v1355
          %v1357 = vpop.f32.mrb[0].mxu0
          %v1358 = vadd.f32 %v1094, %v1357
          %1359 = vmatprep.mubr.bf16.mxu0 0
          %1360 = vmatmul.mubr.bf16.gmra.mrb[0].mxu0 %v1068
          %v1361 = vpop.f32.mrb[0].mxu0
          %v1362 = vadd.f32 %v1090, %v1361
          %v1363 = vpop.f32.mrb[0].mxu0
          %v1364 = vadd.f32 %v1094, %v1363
          %v1365 = vpop.f32.mrb[0].mxu0
          %v1366 = vadd.f32 %v1090, %v1365
          %v1367 = vpop.f32.mrb[0].mxu0
          %v1368 = vadd.f32 %v1094, %v1367
          %1369 = vdwg.mxu0
          %1370 = vst [vmem:[%s319] sm:$0xff] %v1212
          %1371 = vst [vmem:[%s319 + $0x8] sm:$0xff] %v1214
          %1372 = vst [vmem:[%s319 + $0x10] sm:$0xff] %v1216
          %1373 = vst [vmem:[%s319 + $0x18] sm:$0xff] %v1218
          %1374 = vst [vmem:[%s319 + $0x20] sm:$0xff] %v1222
          %1375 = vst [vmem:[%s319 + $0x28] sm:$0xff] %v1224
          %1376 = vst [vmem:[%s319 + $0x30] sm:$0xff] %v1226
          %1377 = vst [vmem:[%s319 + $0x38] sm:$0xff] %v1228
          %1378 = vst [vmem:[%s319 + $0x40] sm:$0xff] %v1232
          %1379 = vst [vmem:[%s319 + $0x48] sm:$0xff] %v1234
          %1380 = vst [vmem:[%s319 + $0x50] sm:$0xff] %v1236
          %1381 = vst [vmem:[%s319 + $0x58] sm:$0xff] %v1238
          %1382 = vst [vmem:[%s319 + $0x60] sm:$0xff] %v1242
          %1383 = vst [vmem:[%s319 + $0x68] sm:$0xff] %v1244
          %1384 = vst [vmem:[%s319 + $0x70] sm:$0xff] %v1246
          %1385 = vst [vmem:[%s319 + $0x78] sm:$0xff] %v1248
          %1386 = vst [vmem:[%s319 + $0x80] sm:$0xff] %v1252
          %1387 = vst [vmem:[%s319 + $0x88] sm:$0xff] %v1254
          %1388 = vst [vmem:[%s319 + $0x90] sm:$0xff] %v1256
          %1389 = vst [vmem:[%s319 + $0x98] sm:$0xff] %v1258
          %1390 = vst [vmem:[%s319 + $0xa0] sm:$0xff] %v1262
          %1391 = vst [vmem:[%s319 + $0xa8] sm:$0xff] %v1264
          %1392 = vst [vmem:[%s319 + $0xb0] sm:$0xff] %v1266
          %1393 = vst [vmem:[%s319 + $0xb8] sm:$0xff] %v1268
          %1394 = vst [vmem:[%s319 + $0xc0] sm:$0xff] %v1272
          %1395 = vst [vmem:[%s319 + $0xc8] sm:$0xff] %v1274
          %1396 = vst [vmem:[%s319 + $0xd0] sm:$0xff] %v1276
          %1397 = vst [vmem:[%s319 + $0xd8] sm:$0xff] %v1278
          %1398 = vst [vmem:[%s319 + $0xe0] sm:$0xff] %v1282
          %1399 = vst [vmem:[%s319 + $0xe8] sm:$0xff] %v1284
          %1400 = vst [vmem:[%s319 + $0xf0] sm:$0xff] %v1286
          %1401 = vst [vmem:[%s319 + $0xf8] sm:$0xff] %v1288
          %1402 = vst [vmem:[%s319 + $0x100] sm:$0xff] %v1292
          %1403 = vst [vmem:[%s319 + $0x108] sm:$0xff] %v1294
          %1404 = vst [vmem:[%s319 + $0x110] sm:$0xff] %v1296
          %1405 = vst [vmem:[%s319 + $0x118] sm:$0xff] %v1298
          %1406 = vst [vmem:[%s319 + $0x120] sm:$0xff] %v1302
          %1407 = vst [vmem:[%s319 + $0x128] sm:$0xff] %v1304
          %1408 = vst [vmem:[%s319 + $0x130] sm:$0xff] %v1306
          %1409 = vst [vmem:[%s319 + $0x138] sm:$0xff] %v1308
          %1410 = vst [vmem:[%s319 + $0x140] sm:$0xff] %v1312
          %1411 = vst [vmem:[%s319 + $0x148] sm:$0xff] %v1314
          %1412 = vst [vmem:[%s319 + $0x150] sm:$0xff] %v1316
          %1413 = vst [vmem:[%s319 + $0x158] sm:$0xff] %v1318
          %1414 = vst [vmem:[%s319 + $0x160] sm:$0xff] %v1322
          %1415 = vst [vmem:[%s319 + $0x168] sm:$0xff] %v1324
          %1416 = vst [vmem:[%s319 + $0x170] sm:$0xff] %v1326
          %1417 = vst [vmem:[%s319 + $0x178] sm:$0xff] %v1328
          %1418 = vst [vmem:[%s319 + $0x180] sm:$0xff] %v1332
          %1419 = vst [vmem:[%s319 + $0x188] sm:$0xff] %v1334
          %1420 = vst [vmem:[%s319 + $0x190] sm:$0xff] %v1336
          %1421 = vst [vmem:[%s319 + $0x198] sm:$0xff] %v1338
          %1422 = vst [vmem:[%s319 + $0x1a0] sm:$0xff] %v1342
          %1423 = vst [vmem:[%s319 + $0x1a8] sm:$0xff] %v1344
          %1424 = vst [vmem:[%s319 + $0x1b0] sm:$0xff] %v1346
          %1425 = vst [vmem:[%s319 + $0x1b8] sm:$0xff] %v1348
          %1426 = vst [vmem:[%s319 + $0x1c0] sm:$0xff] %v1352
          %1427 = vst [vmem:[%s319 + $0x1c8] sm:$0xff] %v1354
          %1428 = vst [vmem:[%s319 + $0x1d0] sm:$0xff] %v1356
          %1429 = vst [vmem:[%s319 + $0x1d8] sm:$0xff] %v1358
          %1430 = vst [vmem:[%s319 + $0x1e0] sm:$0xff] %v1362
          %1431 = vst [vmem:[%s319 + $0x1e8] sm:$0xff] %v1364
          %1432 = vst [vmem:[%s319 + $0x1f0] sm:$0xff] %v1366
          %1433 = vst [vmem:[%s319 + $0x1f8] sm:$0xff] %v1368
        $region68: #{tpu_custom_call.1} parent=43 // pred_fallthru
          _
        %s1434 = sand.u32 %s181, 1
        %s1435 = scalar_lea.sflag [#allocation7], %s1434
        %s1436 = sand.u32 %s181, 1
        %s1437 = smul.addr %s1436, 512
        %s1438 = scalar_lea.vmem [#allocation11], %s1437
        // Predicated region
        $region73: #{tpu_custom_call.1} parent=43 // pred_check
          %p1439 = pneg %p191
        $region74: #{tpu_custom_call.1} parent=43 // pred_check_branch
          %1441 = sbr.rel (%p1439) target = $region76
        $region75: #{tpu_custom_call.1} parent=43 // pred_region
          %s1442 = smul.u32 %s28, %s29
          %s1443 = smul.u32 32, %s1442
          %s1445 = ssub.s32 8192, 8192
          %1446 = vsyncadd %s1435, %s1445
          %s1447 = smul.addr %s1443, 2
          %s1448 = smul.addr %s1447, 128
          %s1449 = scalar_lea.hbm %s6, %s1448
          %s1450 = sshll.u32 %s1438, 4
          %s1451 = int_to_ptr.vmem [resolvable:$true] %s1450
          %1456 = dma.vmem_to_hbm [thread:$0]  %s1451, 8192, %s1449, %s1435, 256, 256, 16
        $region76: #{tpu_custom_call.1} parent=43 // pred_fallthru
          _
      $region44: #{tpu_custom_call.1} parent=5 // pred_fallthru
        _
      %p1457 = scmp.le.s32.totalorder 2, %s19
      // Predicated region
      $region77: #{tpu_custom_call.1} parent=5 // pred_check
        %p1458 = pneg %p1457
      $region78: #{tpu_custom_call.1} parent=5 // pred_check_branch
        %1460 = sbr.rel (%p1458) target = $region80
      $region79: #{tpu_custom_call.1} parent=5 // pred_region
        %s1461 = ssub.s32 %s19, 2
        // Predicated region
        $region81: #{tpu_custom_call.1} parent=79 // pred_check
          %p1462 = pneg %p197
        $region82: #{tpu_custom_call.1} parent=79 // pred_check_branch
          %1464 = sbr.rel (%p1462) target = $region84
        $region83: #{tpu_custom_call.1} parent=79 // pred_region
          %s1465 = sand.u32 %s182, 1
          %s1466 = scalar_lea.sflag [#allocation7], %s1465
          %s1467 = sand.u32 %s182, 1
          %s1468 = smul.addr %s1467, 512
          %s1469 = scalar_lea.vmem [#allocation11], %s1468
          %1470 = dma.done %s1466, 8192
        $region84: #{tpu_custom_call.1} parent=79 // pred_fallthru
          _
      $region80: #{tpu_custom_call.1} parent=5 // pred_fallthru
        _
    $region6: #{tpu_custom_call.1} parent=1 // loop_footer
      %s23 = sadd.s32 1, %s19
    $region7: #{tpu_custom_call.1} parent=1 // loop_footer_branch
      %18 = sbr.rel target = $region3
    $region8: #{tpu_custom_call.1} parent=1 // loop_exit
      _
    %1471 = vsyncpa [#allocation6], 1
    %s1472 = scalar_lea.sflag [#allocation6], 1
    %1473 = vsyncpa %s1472, 1
    %1474 = vsyncpa [#allocation9], 1
    %1475 = vsyncpa [#allocation7], 1
    %s1476 = scalar_lea.sflag [#allocation7], 1
    %1477 = vsyncpa %s1476, 1

</llo_original>
